<compile_context>
chip_gen: v6e
topology: v6e:2x2x1
jax: 0.10.0
libtpu: 0.0.40
codegen_flags: <defaults>
</compile_context>

<pallas_src>
import jax
import jax.numpy as jnp
from jax.experimental import pallas as pl
from jax.experimental.pallas import tpu as pltpu

_VMEM_LIMIT = 32 * 1024 * 1024        # explicit scoped-VMEM limit (safe on v5e..v7x)
_VMEM_BUDGET = 16 * 1024 * 1024       # target working set used to size row tiles


def _pick_row_tile(h, cap):
    """Pick a row tile TH <= cap. Prefer an exact divisor of h; if only a tiny
    divisor exists (awkward/prime h), pad h up instead of collapsing TH."""
    cap = int(max(1, min(h, cap)))
    t = cap
    while h % t:
        t -= 1
    if t >= min(8, cap):
        return t, h
    t = cap
    hp = ((h + t - 1) // t) * t
    return t, hp


def _rows_for_budget(bytes_per_row, budget=_VMEM_BUDGET, cap=64):
    return int(max(8, min(cap, budget // max(1, bytes_per_row))))


# ----------------------------------------------------------------------------
# Kernel 1: ConvTranspose2d(k=2, s=2, p=0) with the pixel interleave fused in.
#   out[2i+di, 2j+dj, co] = sum_ci x[i,j,ci] * W[ci, co, di, dj] + b[co]
# Single fat matmul (Cin, 4*Cout) covers both di halves; the output buffer
# (N, H, 2, W, 2*Cout) is row-major identical to (N, 2H, 2W, Cout).
# ----------------------------------------------------------------------------
def _deconv2x2_kernel(x_ref, w_ref, b_ref, o_ref):
    # x_ref: (1, TH, W, Cin)   w_ref: (Cin, 4*Cout) cols = (di, dj, co)
    # b_ref: (1, 2*Cout) cols = (dj, co)   o_ref: (1, TH, 2, W, 2*Cout)
    _, TH, W, Cin = x_ref.shape
    C2 = o_ref.shape[-1]                                    # 2*Cout
    x = x_ref[...].reshape(TH * W, Cin).astype(w_ref.dtype)
    y = jnp.dot(x, w_ref[...], preferred_element_type=jnp.float32)
    b = b_ref[...]                                          # (1, 2*Cout) f32
    o_ref[0, :, 0, :, :] = (y[:, 0:C2] + b).reshape(TH, W, C2).astype(o_ref.dtype)
    o_ref[0, :, 1, :, :] = (y[:, C2:2 * C2] + b).reshape(TH, W, C2).astype(o_ref.dtype)


def deconv2x2(x_nhwc, w2, b2, *, out_dtype, row_cap=None):
    """x_nhwc: (N,H,W,Cin); w2: (Cin, 4*Cout) prepared weight; b2: (1, 2*Cout).
    Returns (N, 2H, 2W, Cout) in NHWC with dtype `out_dtype`."""
    N, H, W, Cin = x_nhwc.shape
    C4 = int(w2.shape[1])
    C2 = C4 // 2
    Cout = C2 // 2
    if row_cap is None:
        per_row = (W * Cin * (x_nhwc.dtype.itemsize * 2 + w2.dtype.itemsize)
                   + W * C4 * 4
                   + W * 2 * C2 * jnp.dtype(out_dtype).itemsize * 2)
        row_cap = _rows_for_budget(per_row)
    TH, Hp = _pick_row_tile(H, row_cap)
    if Hp != H:
        x_nhwc = jnp.pad(x_nhwc, ((0, 0), (0, Hp - H), (0, 0), (0, 0)))
    nh = Hp // TH

    out5 = pl.pallas_call(
        _deconv2x2_kernel,
        out_shape=jax.ShapeDtypeStruct((N, Hp, 2, W, C2), out_dtype),
        grid_spec=pltpu.PrefetchScalarGridSpec(
            num_scalar_prefetch=0,
            grid=(N, nh),
            in_specs=[
                pl.BlockSpec((1, TH, W, Cin), lambda n, h: (n, h, 0, 0)),
                pl.BlockSpec((Cin, C4), lambda n, h: (0, 0)),
                pl.BlockSpec((1, C2), lambda n, h: (0, 0)),
            ],
            out_specs=pl.BlockSpec((1, TH, 2, W, C2),
                                   lambda n, h: (n, h, 0, 0, 0)),
        ),
        compiler_params=pltpu.CompilerParams(
            dimension_semantics=("parallel", "parallel"),
            vmem_limit_bytes=_VMEM_LIMIT),
    )(x_nhwc, w2, b2)

    out = out5.reshape(N, 2 * Hp, 2 * W, Cout)     # free row-major reshape
    if Hp != H:
        out = out[:, :2 * H]
    return out


# ----------------------------------------------------------------------------
# Kernel 2: Conv2d(3x3, s=1, p=1) + ReLU over several un-concatenated input
# groups (conv(concat(a,b)) == conv_a(a) + conv_b(b)).  Row-tiled input with a
# 1-row halo fetched via clamped single-row BlockSpecs; halo padding assembled
# in a VMEM scratch with border-only zeroing; one K = 9*Cp matmul per part.
# ----------------------------------------------------------------------------
def _make_conv3x3_relu_kernel(num_parts, compute_dtype):
    def kernel(*refs):
        xm = refs[0:num_parts]                       # (1, TH, W, Cp)
        xa = refs[num_parts:2 * num_parts]           # (1, 1, W, Cp) row above
        xb = refs[2 * num_parts:3 * num_parts]       # (1, 1, W, Cp) row below
        wr = refs[3 * num_parts:4 * num_parts]       # (9*Cp, Cout)
        b_ref = refs[4 * num_parts]                  # (1, Cout) f32
        o_ref = refs[4 * num_parts + 1]              # (1, TH, W, Cout)
        pads = refs[4 * num_parts + 2:]              # VMEM (TH+2, W+2, Cp) f32

        _, TH, W, Cout = o_ref.shape
        h = pl.program_id(1)
        nh = pl.num_programs(1)
        top = (h > 0).astype(jnp.float32)            # 0 at image top edge
        bot = (h < nh - 1).astype(jnp.float32)       # 0 at image bottom edge

        acc = jnp.zeros((TH * W, Cout), jnp.float32) + b_ref[...]

        for p in range(num_parts):
            pad = pads[p]
            Cp = xm[p].shape[-1]

            # Zero only the 1-px left/right border columns.
            zcol = jnp.zeros((TH + 2, 1, Cp), jnp.float32)
            pad[:, 0:1, :] = zcol
            pad[:, W + 1:W + 2, :] = zcol
            # Interior rows + halo rows (halo scaled to zero at image edges).
            pad[1:TH + 1, 1:W + 1, :] = xm[p][0].astype(jnp.float32)
            pad[0:1, 1:W + 1, :] = xa[p][0].astype(jnp.float32) * top
            pad[TH + 1:TH + 2, 1:W + 1, :] = xb[p][0].astype(jnp.float32) * bot

            # im2col: 3 dx-shifted windows -> one lane concat; dy taps are
            # free major-axis slices; single fat K = 9*Cp matmul per part.
            padv = pad[...]                                      # (TH+2, W+2, Cp)
            slab = jnp.concatenate(
                [padv[:, 0:W, :], padv[:, 1:W + 1, :], padv[:, 2:W + 2, :]],
                axis=-1)                                         # (TH+2, W, 3Cp)
            patch = jnp.concatenate(
                [slab[0:TH], slab[1:TH + 1], slab[2:TH + 2]],
                axis=-1).reshape(TH * W, 9 * Cp)
            acc = acc + jnp.dot(patch.astype(compute_dtype), wr[p][...],
                                preferred_element_type=jnp.float32)

        acc = jnp.maximum(acc, 0.0)                              # fused ReLU
        o_ref[...] = acc.reshape(1, TH, W, Cout).astype(o_ref.dtype)

    return kernel


def conv3x3_relu_fused(parts, w_groups, bias_row, *, out_dtype, row_cap=None):
    """Conv2d(3,1,1)+ReLU over the channel-concatenation of `parts`, without
    materializing the concat.

    parts:    list of NHWC arrays (N, H, W, C_p)
    w_groups: list of prepared weights (9*C_p, Cout), rows ordered (dy, dx, ci)
    bias_row: (1, Cout) float32
    """
    N, Hc, W, _ = parts[0].shape
    Cout = int(w_groups[0].shape[-1])
    cps = [int(p.shape[3]) for p in parts]
    cdt = w_groups[0].dtype
    cbytes = jnp.dtype(cdt).itemsize

    if row_cap is None:
        per_row = sum(W * c * (p.dtype.itemsize * 2 + 4 + cbytes * 12)
                      for c, p in zip(cps, parts))
        per_row += W * Cout * (4 * 2 + jnp.dtype(out_dtype).itemsize * 2)
        row_cap = _rows_for_budget(per_row)
    TH, Hp = _pick_row_tile(Hc, row_cap)
    if Hp != Hc:
        parts = [jnp.pad(p, ((0, 0), (0, Hp - Hc), (0, 0), (0, 0)))
                 for p in parts]
    nh = Hp // TH
    P = len(parts)

    def main_map(n, h):
        return (n, h, 0, 0)

    def above_map(n, h):                      # block size 1 on H => element row
        return (n, jnp.maximum(h * TH - 1, 0), 0, 0)

    def below_map(n, h):
        return (n, jnp.minimum(h * TH + TH, Hp - 1), 0, 0)

    def full_map(n, h):
        return (0, 0)

    in_specs = (
        [pl.BlockSpec((1, TH, W, c), main_map) for c in cps]
        + [pl.BlockSpec((1, 1, W, c), above_map) for c in cps]
        + [pl.BlockSpec((1, 1, W, c), below_map) for c in cps]
        + [pl.BlockSpec((9 * c, Cout), full_map) for c in cps]
        + [pl.BlockSpec((1, Cout), full_map)]
    )
    scratch = [pltpu.VMEM((TH + 2, W + 2, c), jnp.float32) for c in cps]

    out = pl.pallas_call(
        _make_conv3x3_relu_kernel(P, cdt),
        out_shape=jax.ShapeDtypeStruct((N, Hp, W, Cout), out_dtype),
        grid_spec=pltpu.PrefetchScalarGridSpec(
            num_scalar_prefetch=0,
            grid=(N, nh),
            in_specs=in_specs,
            out_specs=pl.BlockSpec((1, TH, W, Cout), main_map),
            scratch_shapes=scratch),
        compiler_params=pltpu.CompilerParams(
            dimension_semantics=("parallel", "parallel"),
            vmem_limit_bytes=_VMEM_LIMIT),
    )(*parts, *parts, *parts, *w_groups, bias_row)

    if Hp != Hc:
        out = out[:, :Hc]
    return out


# ----------------------------------------------------------------------------
# unetUp module (is_deconv=True) with deterministic kaiming-style init
# (fan_in mode), mirroring weights_init_kaiming.
# ----------------------------------------------------------------------------
class UnetUpPallas:
    def __init__(self, in_size, out_size, key, n_concat=2,
                 compute_dtype=jnp.bfloat16):
        k1, k2, k3, k4, k5, k6 = jax.random.split(key, 6)
        self.in_size, self.out_size = in_size, out_size
        self.compute_dtype = compute_dtype

        # Raw (PyTorch-layout, f32) parameters.
        fan_in_up = out_size * 2 * 2
        self.up_w = jax.random.normal(k1, (in_size, out_size, 2, 2),
                                      jnp.float32) * (2.0 / fan_in_up) ** 0.5
        self.up_b = jax.random.normal(k2, (out_size,), jnp.float32) * 0.01
        self.conv_in = (96 if out_size == 64
                        else in_size + (n_concat - 2) * out_size)
        self.c1_w = jax.random.normal(
            k3, (out_size, self.conv_in, 3, 3), jnp.float32
        ) * (2.0 / (self.conv_in * 9)) ** 0.5
        self.c1_b = jax.random.normal(k4, (out_size,), jnp.float32) * 0.01
        self.c2_w = jax.random.normal(
            k5, (out_size, out_size, 3, 3), jnp.float32
        ) * (2.0 / (out_size * 9)) ** 0.5
        self.c2_b = jax.random.normal(k6, (out_size,), jnp.float32) * 0.01

        # Kernel-ready layouts, hoisted out of the forward pass.
        cdt = compute_dtype
        # (Cin,Cout,2,2)[ci,co,di,dj] -> (Cin, 4*Cout), cols ordered (di,dj,co).
        self.up_w2 = jnp.transpose(self.up_w, (0, 2, 3, 1)).reshape(
            in_size, 4 * out_size).astype(cdt)
        self.up_b2 = jnp.tile(self.up_b, 2).reshape(1, 2 * out_size)
        # (Cout,Cin,3,3) -> (dy,dx,ci,co); per-group slices reshaped at call.
        self.c1_wt = jnp.transpose(self.c1_w, (2, 3, 1, 0)).astype(cdt)
        self.c1_b2 = self.c1_b.reshape(1, out_size)
        self.c2_wp = jnp.transpose(self.c2_w, (2, 3, 1, 0)).reshape(
            9 * out_size, out_size).astype(cdt)
        self.c2_b2 = self.c2_b.reshape(1, out_size)

    def __call__(self, high_feature_nchw, *low_feature_nchw):
        cdt = self.compute_dtype
        x = jnp.transpose(high_feature_nchw, (0, 2, 3, 1))        # NCHW -> NHWC
        up = deconv2x2(x, self.up_w2, self.up_b2, out_dtype=cdt)  # self.up

        # conv1 on the (virtual) concat [up, *lows]: split weight per group.
        parts = [up] + [jnp.transpose(f, (0, 2, 3, 1)) for f in low_feature_nchw]
        ch = [int(p.shape[3]) for p in parts]
        assert sum(ch) == self.conv_in, (ch, self.conv_in)
        w_groups, off = [], 0
        for c in ch:
            w_groups.append(
                self.c1_wt[:, :, off:off + c, :].reshape(9 * c, self.out_size))
            off += c
        y = conv3x3_relu_fused(parts, w_groups, self.c1_b2, out_dtype=cdt)
        y = conv3x3_relu_fused([y], [self.c2_wp], self.c2_b2,
                               out_dtype=jnp.float32)
        return jnp.transpose(y, (0, 3, 1, 2))                     # NHWC -> NCHW


# ----------------------------------------------------------------------------
# Pure-JAX reference (f32, HIGHEST precision) used to validate the kernels.
# ----------------------------------------------------------------------------
def _ref_forward(high_nchw, lows_nchw, m):
    hi = jax.lax.Precision.HIGHEST
    x = jnp.transpose(high_nchw, (0, 2, 3, 1))
    N, H, W, _ = x.shape
    Cout = m.up_w.shape[1]
    up = jnp.einsum('nijc,code->nidjeo', x, m.up_w, precision=hi)
    up = up.reshape(N, 2 * H, 2 * W, Cout) + m.up_b
    cat = jnp.concatenate(
        [up] + [jnp.transpose(f, (0, 2, 3, 1)) for f in lows_nchw], axis=-1)

    def conv(xn, w, b):
        Np, Hp, Wp, _ = xn.shape
        Co = w.shape[0]
        xp = jnp.pad(xn, ((0, 0), (1, 1), (1, 1), (0, 0)))
        acc = jnp.zeros((Np, Hp, Wp, Co), jnp.float32) + b
        for dy in range(3):
            for dx in range(3):
                acc = acc + jnp.einsum('nhwc,oc->nhwo',
                                       xp[:, dy:dy + Hp, dx:dx + Wp, :],
                                       w[:, :, dy, dx], precision=hi)
        return jnp.maximum(acc, 0.0)

    y = conv(cat, m.c1_w, m.c1_b)
    y = conv(y, m.c2_w, m.c2_b)
    return jnp.transpose(y, (0, 3, 1, 2))


if __name__ == "__main__":
    key = jax.random.PRNGKey(0)
    kp, kh, kl = jax.random.split(key, 3)

    in_size, out_size = 8, 4          # conv_in = in_size = 2*out_size
    N, Hh, Wh = 2, 32, 32             # high-feature spatial (-> 64x64 output)
    high = jax.random.normal(kh, (N, in_size, Hh, Wh), jnp.float32)
    low = jax.random.normal(kl, (N, out_size, 2 * Hh, 2 * Wh), jnp.float32)

    # Exact f32-operand path (validates layout / indexing).
    mod_f32 = UnetUpPallas(in_size, out_size, kp, compute_dtype=jnp.float32)
    out_f32 = mod_f32(high, low)
    jax.block_until_ready(out_f32)
    assert out_f32.shape == (N, out_size, 2 * Hh, 2 * Wh), out_f32.shape

    ref = _ref_forward(high, [low], mod_f32)
    err_f32 = float(jnp.max(jnp.abs(out_f32 - ref)))
    assert err_f32 < 2e-2, f"f32 path max abs error vs reference: {err_f32}"

    # bf16 MXU-operand path (default perf config, f32 accumulation).
    mod_bf16 = UnetUpPallas(in_size, out_size, kp, compute_dtype=jnp.bfloat16)
    out_bf16 = mod_bf16(high, low)
    jax.block_until_ready(out_bf16)
    err_bf16 = float(jnp.max(jnp.abs(out_bf16 - ref)))
    mean_bf16 = float(jnp.mean(jnp.abs(out_bf16 - ref)))
    assert err_bf16 < 3e-1 and mean_bf16 < 3e-2, (err_bf16, mean_bf16)

    print("KERNEL_OK")
</pallas_src>

<mosaic_0001>
module attributes {stable_mosaic.version = 11 : i64} {
  func.func @_deconv2x2_kernel(%arg0: i32, %arg1: i32, %arg2: memref<1x32x32x8xf32, #tpu.memory_space<vmem>>, %arg3: memref<8x16xf32, #tpu.memory_space<vmem>>, %arg4: memref<1x8xf32, #tpu.memory_space<vmem>>, %arg5: memref<1x32x2x32x8xf32, #tpu.memory_space<vmem>>) attributes {dimension_semantics = [#tpu.dimension_semantics<parallel>, #tpu.dimension_semantics<parallel>], iteration_bounds = array<i64: 2, 1>, scalar_prefetch = 0 : i64, scratch_operands = 0 : i64, tpu.core_type = #tpu.core_type<tc>, window_params = [{transform_indices = @transform_0, window_bounds = array<i64: 1, 32, 32, 8>}, {pipeline_mode = #tpu.pipeline_mode<synchronous>, transform_indices = @transform_1, window_bounds = array<i64: 8, 16>}, {pipeline_mode = #tpu.pipeline_mode<synchronous>, transform_indices = @transform_2, window_bounds = array<i64: 1, 8>}, {transform_indices = @transform_3, window_bounds = array<i64: 1, 32, 2, 32, 8>}]} {
    %c0 = arith.constant 0 : index
    %c0_0 = arith.constant 0 : index
    %c0_1 = arith.constant 0 : index
    %c0_2 = arith.constant 0 : index
    %0 = vector.load %arg2[%c0, %c0_0, %c0_1, %c0_2] : memref<1x32x32x8xf32, #tpu.memory_space<vmem>>, vector<1x32x32x8xf32>
    %1 = vector.shape_cast %0 : vector<1x32x32x8xf32> to vector<1024x8xf32>
    %c0_3 = arith.constant 0 : index
    %c0_4 = arith.constant 0 : index
    %2 = vector.load %arg3[%c0_3, %c0_4] : memref<8x16xf32, #tpu.memory_space<vmem>>, vector<8x16xf32>
    %cst = arith.constant dense<0.000000e+00> : vector<1024x16xf32>
    %3 = tpu.matmul %1, %2, %cst {dimension_numbers = #tpu.dot_dimension_numbers<[1], [0], [0], [1], [0, 0, 1, 1], [], []>} : vector<1024x8xf32>, vector<8x16xf32>, vector<1024x16xf32> -> vector<1024x16xf32>
    %c0_5 = arith.constant 0 : index
    %c0_6 = arith.constant 0 : index
    %4 = vector.load %arg4[%c0_5, %c0_6] : memref<1x8xf32, #tpu.memory_space<vmem>>, vector<1x8xf32>
    %5 = vector.extract_strided_slice %3 {offsets = [0, 0], sizes = [1024, 8], strides = [1, 1]} : vector<1024x16xf32> to vector<1024x8xf32>
    %6 = vector.broadcast %4 : vector<1x8xf32> to vector<1024x8xf32>
    %7 = arith.addf %5, %6 : vector<1024x8xf32>
    %8 = vector.shape_cast %7 : vector<1024x8xf32> to vector<32x32x8xf32>
    %c0_7 = arith.constant 0 : index
    %c0_8 = arith.constant 0 : index
    %c0_9 = arith.constant 0 : index
    %c0_10 = arith.constant 0 : index
    %c0_11 = arith.constant 0 : index
    %9 = vector.load %arg5[%c0_7, %c0_8, %c0_9, %c0_10, %c0_11] : memref<1x32x2x32x8xf32, #tpu.memory_space<vmem>>, vector<1x32x1x32x8xf32>
    %10 = vector.shape_cast %9 : vector<1x32x1x32x8xf32> to vector<32x32x8xf32>
    %11 = vector.shape_cast %8 : vector<32x32x8xf32> to vector<1x32x1x32x8xf32>
    tpu.vector_store %arg5[%c0_7, %c0_8, %c0_9, %c0_10, %c0_11], %11 {strides = array<i32>} : memref<1x32x2x32x8xf32, #tpu.memory_space<vmem>>, vector<1x32x1x32x8xf32>,
    %12 = vector.extract_strided_slice %3 {offsets = [0, 8], sizes = [1024, 8], strides = [1, 1]} : vector<1024x16xf32> to vector<1024x8xf32>
    %13 = vector.broadcast %4 : vector<1x8xf32> to vector<1024x8xf32>
    %14 = arith.addf %12, %13 : vector<1024x8xf32>
    %15 = vector.shape_cast %14 : vector<1024x8xf32> to vector<32x32x8xf32>
    %c0_12 = arith.constant 0 : index
    %c0_13 = arith.constant 0 : index
    %c1 = arith.constant 1 : index
    %c0_14 = arith.constant 0 : index
    %c0_15 = arith.constant 0 : index
    %16 = vector.load %arg5[%c0_12, %c0_13, %c1, %c0_14, %c0_15] : memref<1x32x2x32x8xf32, #tpu.memory_space<vmem>>, vector<1x32x1x32x8xf32>
    %17 = vector.shape_cast %16 : vector<1x32x1x32x8xf32> to vector<32x32x8xf32>
    %18 = vector.shape_cast %15 : vector<32x32x8xf32> to vector<1x32x1x32x8xf32>
    tpu.vector_store %arg5[%c0_12, %c0_13, %c1, %c0_14, %c0_15], %18 {strides = array<i32>} : memref<1x32x2x32x8xf32, #tpu.memory_space<vmem>>, vector<1x32x1x32x8xf32>,
    return
  }
  func.func @transform_0(%arg0: i32, %arg1: i32) -> (i32, i32, i32, i32) {
    %c0_i32 = arith.constant 0 : i32
    %c0_i32_0 = arith.constant 0 : i32
    %c0_i32_1 = arith.constant 0 : i32
    return %arg0, %arg1, %c0_i32, %c0_i32_0 : i32, i32, i32, i32
  }
  func.func @transform_1(%arg0: i32, %arg1: i32) -> (i32, i32) {
    %c0_i32 = arith.constant 0 : i32
    %c0_i32_0 = arith.constant 0 : i32
    %c0_i32_1 = arith.constant 0 : i32
    return %c0_i32, %c0_i32_0 : i32, i32
  }
  func.func @transform_2(%arg0: i32, %arg1: i32) -> (i32, i32) {
    %c0_i32 = arith.constant 0 : i32
    %c0_i32_0 = arith.constant 0 : i32
    %c0_i32_1 = arith.constant 0 : i32
    return %c0_i32, %c0_i32_0 : i32, i32
  }
  func.func @transform_3(%arg0: i32, %arg1: i32) -> (i32, i32, i32, i32, i32) {
    %c0_i32 = arith.constant 0 : i32
    %c0_i32_0 = arith.constant 0 : i32
    %c0_i32_1 = arith.constant 0 : i32
    %c0_i32_2 = arith.constant 0 : i32
    return %arg0, %arg1, %c0_i32, %c0_i32_0, %c0_i32_1 : i32, i32, i32, i32, i32
  }
}

</mosaic_0001>

<llo_original>
// kernel: tpu_custom_call.1
$region0: #{tpu_custom_call.1}
  #allocation0 [shape = 'u32[]', space=smem, size = 0x4, offset = 0x4, fixed_abs, tag = 'smem constant byte address 0x4 - core index']
  #allocation1 [shape = 'u32[144,128]{1,0:T(1,128)}', space=vmem, size = 0x12000, scoped, tag = 'internal scratch']
  %s0 = inlined_call_operand.vmem [shape: f32[2,32,32,8], index: 0, kind: input, shape index: {}]
  %s1 = inlined_call_operand.hbm [shape: f32[8,16], index: 1, kind: input, shape index: {}]
  %s2 = inlined_call_operand.hbm [shape: f32[1,8], index: 2, kind: input, shape index: {}]
  %s3 = inlined_call_operand.vmem [shape: f32[2,32,2,32,8], index: 3, kind: output, shape index: {}]
  %s4 = sld [smem:[#allocation0]]
  $region53: #{tpu_custom_call.1} parent=0
    _
  %s6 = ssub.s32 1, %s4
  %s7 = scalar_select 0, %s6, %s4
  $region1: #{tpu_custom_call.1} parent=0
    #allocation2 [shape = 'u8[4096]{0}', space=vmem, size = 0x1000, scoped, tag = 'input window, operand 1, single buffered']
    #allocation3 [shape = 's32[2]{0}', space=sflag, size = 0x8, scoped, tag = 'scoped memory for tpu_custom_call.1']
    #allocation4 [shape = 'u8[512]{0}', space=vmem, size = 0x400, scoped, tag = 'input window, operand 2, single buffered']
    #allocation5 [shape = 's32[1]{0}', space=sflag, size = 0x4, scoped, tag = 'scoped memory for tpu_custom_call.1']
    %8 = vsyncpa [#allocation3], 0
    %9 = vsyncpa [#allocation5], 0
    loop: start=0, step=1, limit=4
    $region2: #{tpu_custom_call.1} parent=1 // loop_pre_header
      _
    $region3: #{tpu_custom_call.1} parent=1 // loop_header
      %s11 = sphi 0, %s15
      %p12 = scmp.ge.s32.totalorder %s11, 4
      %s18 = sphi 0, %s30
      %s19 = sphi 0, %s26
      %s20 = sphi 0, %s18
      %s21 = sphi 0, %s19
      %s22 = sphi 0, %s20
      %s23 = sphi 0, %s21
      %s35 = sphi 0, %s37
      %s38 = sphi 0, %s35
      %s39 = sphi 0, %s38
      %s55 = sphi 0, %s39
      %s59 = sphi 0, %s59
      %s61 = sphi 0, %s59
      %s62 = sphi 0, %s61
      %s76 = sphi 0, %s62
      %s80 = sphi 0, %s80
      %s82 = sphi 0, %s80
      %s83 = sphi 0, %s82
      %s97 = sphi 0, %s83
      %s105 = sphi 0, %s107
      %s108 = sphi 0, %s105
      %s109 = sphi 0, %s108
      %s125 = sphi 0, %s109
    $region4: #{tpu_custom_call.1} parent=1 // loop_header_branch
      %14 = sbr.rel (%p12) target = $region8
    $region5: #{tpu_custom_call.1} parent=1 // loop_body
      %s16 = ssub.s32 %s11, 1
      %s17 = ssub.s32 %s11, 2
      %s24 = sadd.s32 1, %s19
      %p25 = scmp.ge.s32.totalorder %s24, 1
      %s26 = scalar_select %p25, 0, %s24
      %s27 = sadd.s32 1, %s18
      %s28 = scalar_select %p25, %s27, %s18
      %p29 = scmp.ge.s32.totalorder %s28, 2
      %s30 = scalar_select %p29, 0, %s28
      %s31 = ssub.s32 %s18, %s30
      %s32 = ssub.s32 %s19, %s26
      %s33 = sor.u32 %s31, %s32
      %p34 = scmp.eq.s32.totalorder %s33, 0
      %s36 = sadd.s32 %s35, 1
      %s37 = scalar_select %p34, %s35, %s36
      %p40 = pneg %p34
      %p41 = scmp.eq.s32.totalorder %s11, 1
      %p42 = por %p40, %p41
      %p43 = scmp.ne.s32.totalorder %s35, %s38
      %p44 = scmp.eq.s32.totalorder %s11, 0
      %p45 = por %p43, %p44
      %p46 = scmp.ne.s32.totalorder %s35, %s38
      %p47 = scmp.eq.s32.totalorder %s16, 1
      %p48 = por %p46, %p47
      %p49 = scmp.ne.s32.totalorder %s38, %s39
      %p50 = scmp.eq.s32.totalorder %s16, 0
      %p51 = por %p49, %p50
      %p52 = scmp.ne.s32.totalorder %s38, %s39
      %p53 = scmp.eq.s32.totalorder %s17, 1
      %p54 = por %p52, %p53
      %p56 = scmp.ne.s32.totalorder %s39, %s55
      %p57 = scmp.eq.s32.totalorder %s17, 0
      %p58 = por %p56, %p57
      %s60 = sadd.s32 %s59, 1
      %p63 = scmp.eq.s32.totalorder %s11, 1
      %p64 = scmp.ne.s32.totalorder %s59, %s61
      %p65 = scmp.eq.s32.totalorder %s11, 0
      %p66 = por %p64, %p65
      %p67 = scmp.ne.s32.totalorder %s59, %s61
      %p68 = scmp.eq.s32.totalorder %s16, 1
      %p69 = por %p67, %p68
      %p70 = scmp.ne.s32.totalorder %s61, %s62
      %p71 = scmp.eq.s32.totalorder %s16, 0
      %p72 = por %p70, %p71
      %p73 = scmp.ne.s32.totalorder %s61, %s62
      %p74 = scmp.eq.s32.totalorder %s17, 1
      %p75 = por %p73, %p74
      %p77 = scmp.ne.s32.totalorder %s62, %s76
      %p78 = scmp.eq.s32.totalorder %s17, 0
      %p79 = por %p77, %p78
      %s81 = sadd.s32 %s80, 1
      %p84 = scmp.eq.s32.totalorder %s11, 1
      %p85 = scmp.ne.s32.totalorder %s80, %s82
      %p86 = scmp.eq.s32.totalorder %s11, 0
      %p87 = por %p85, %p86
      %p88 = scmp.ne.s32.totalorder %s80, %s82
      %p89 = scmp.eq.s32.totalorder %s16, 1
      %p90 = por %p88, %p89
      %p91 = scmp.ne.s32.totalorder %s82, %s83
      %p92 = scmp.eq.s32.totalorder %s16, 0
      %p93 = por %p91, %p92
      %p94 = scmp.ne.s32.totalorder %s82, %s83
      %p95 = scmp.eq.s32.totalorder %s17, 1
      %p96 = por %p94, %p95
      %p98 = scmp.ne.s32.totalorder %s83, %s97
      %p99 = scmp.eq.s32.totalorder %s17, 0
      %p100 = por %p98, %p99
      %s101 = ssub.s32 %s18, %s30
      %s102 = ssub.s32 %s19, %s26
      %s103 = sor.u32 %s101, %s102
      %p104 = scmp.eq.s32.totalorder %s103, 0
      %s106 = sadd.s32 %s105, 1
      %s107 = scalar_select %p104, %s105, %s106
      %p110 = pneg %p104
      %p111 = scmp.eq.s32.totalorder %s11, 1
      %p112 = por %p110, %p111
      %p113 = scmp.ne.s32.totalorder %s105, %s108
      %p114 = scmp.eq.s32.totalorder %s11, 0
      %p115 = por %p113, %p114
      %p116 = scmp.ne.s32.totalorder %s105, %s108
      %p117 = scmp.eq.s32.totalorder %s16, 1
      %p118 = por %p116, %p117
      %p119 = scmp.ne.s32.totalorder %s108, %s109
      %p120 = scmp.eq.s32.totalorder %s16, 0
      %p121 = por %p119, %p120
      %p122 = scmp.ne.s32.totalorder %s108, %s109
      %p123 = scmp.eq.s32.totalorder %s17, 1
      %p124 = por %p122, %p123
      %p126 = scmp.ne.s32.totalorder %s109, %s125
      %p127 = scmp.eq.s32.totalorder %s17, 0
      %p128 = por %p126, %p127
      %p129 = scmp.le.s32.totalorder 1, %s11
      %p130 = scmp.lt.s32.totalorder %s11, 3
      %p131 = pnand %p129, %p130
      %p132 = pneg %p131
      // Predicated region
      $region9: #{tpu_custom_call.1} parent=5 // pred_check
        _
      $region10: #{tpu_custom_call.1} parent=5 // pred_check_branch
        %134 = sbr.rel (%p131) target = $region12
      $region11: #{tpu_custom_call.1} parent=5 // pred_region
        %s135 = ssub.s32 %s11, 1
        // Predicated region
        $region13: #{tpu_custom_call.1} parent=11 // pred_check
          %p136 = pneg %p72
        $region14: #{tpu_custom_call.1} parent=11 // pred_check_branch
          %138 = sbr.rel (%p136) target = $region16
        $region15: #{tpu_custom_call.1} parent=11 // pred_region
          %s140 = ssub.s32 128, 128
          %141 = vsyncadd [#allocation3], %s140
          %s143 = sshll.u32 [#allocation2], 4
          %s144 = int_to_ptr.vmem [resolvable:$true] %s143
          %146 = dma.hbm_to_vmem [thread:$0]  %s1, 128, %s144, [#allocation3]
        $region16: #{tpu_custom_call.1} parent=11 // pred_fallthru
          _
        // Predicated region
        $region17: #{tpu_custom_call.1} parent=11 // pred_check
          %p147 = pneg %p93
        $region18: #{tpu_custom_call.1} parent=11 // pred_check_branch
          %149 = sbr.rel (%p147) target = $region20
        $region19: #{tpu_custom_call.1} parent=11 // pred_region
          %s151 = ssub.s32 16, 16
          %152 = vsyncadd [#allocation5], %s151
          %s154 = sshll.u32 [#allocation4], 4
          %s155 = int_to_ptr.vmem [resolvable:$true] %s154
          %157 = dma.hbm_to_vmem [thread:$0]  %s2, 16, %s155, [#allocation5]
        $region20: #{tpu_custom_call.1} parent=11 // pred_fallthru
          _
      $region12: #{tpu_custom_call.1} parent=5 // pred_fallthru
        _
      %p158 = scmp.lt.s32.totalorder %s11, 2
      // Predicated region
      $region21: #{tpu_custom_call.1} parent=5 // pred_check
        %p159 = pneg %p158
      $region22: #{tpu_custom_call.1} parent=5 // pred_check_branch
        %161 = sbr.rel (%p159) target = $region24
      $region23: #{tpu_custom_call.1} parent=5 // pred_region
        // Predicated region
        $region25: #{tpu_custom_call.1} parent=23 // pred_check
          %p162 = pneg %p45
        $region26: #{tpu_custom_call.1} parent=23 // pred_check_branch
          %164 = sbr.rel (%p162) target = $region28
        $region27: #{tpu_custom_call.1} parent=23 // pred_region
          %s165 = smul.u32 32, %s19
          %p166 = scmp.lt.s32.totalorder %s18, 1
          %s167 = scalar_select %p166, %s18, 1
          %p168 = scmp.lt.s32.totalorder %s165, 31
          %s169 = scalar_select %p168, %s165, 31
          %s170 = smul.addr %s169, 4
          %s171 = smul.addr %s167, 128
          %s172 = sadd.s32 %s170, %s171
          %s173 = smul.addr %s172, 8
          %s174 = scalar_lea.vmem %s0, %s173
          %s175 = smul.u32 32, %s19
        $region28: #{tpu_custom_call.1} parent=23 // pred_fallthru
          _
      $region24: #{tpu_custom_call.1} parent=5 // pred_fallthru
        _
      %p176 = scmp.le.s32.totalorder 1, %s11
      %p177 = scmp.lt.s32.totalorder %s11, 3
      %p178 = pnand %p176, %p177
      %p179 = pneg %p178
      // Predicated region
      $region29: #{tpu_custom_call.1} parent=5 // pred_check
        _
      $region30: #{tpu_custom_call.1} parent=5 // pred_check_branch
        %181 = sbr.rel (%p178) target = $region32
      $region31: #{tpu_custom_call.1} parent=5 // pred_region
        %s182 = ssub.s32 %s11, 1
        // Predicated region
        $region33: #{tpu_custom_call.1} parent=31 // pred_check
          %p183 = pneg %p72
        $region34: #{tpu_custom_call.1} parent=31 // pred_check_branch
          %185 = sbr.rel (%p183) target = $region36
        $region35: #{tpu_custom_call.1} parent=31 // pred_region
          %186 = dma.done [#allocation3], 128
        $region36: #{tpu_custom_call.1} parent=31 // pred_fallthru
          _
        // Predicated region
        $region37: #{tpu_custom_call.1} parent=31 // pred_check
          %p187 = pneg %p93
        $region38: #{tpu_custom_call.1} parent=31 // pred_check_branch
          %189 = sbr.rel (%p187) target = $region40
        $region39: #{tpu_custom_call.1} parent=31 // pred_region
          %190 = dma.done [#allocation5], 16
        $region40: #{tpu_custom_call.1} parent=31 // pred_fallthru
          _
        %s191 = smul.u32 32, %s21
        %p192 = scmp.lt.s32.totalorder %s20, 1
        %s193 = scalar_select %p192, %s20, 1
        %p194 = scmp.lt.s32.totalorder %s191, 31
        %s195 = scalar_select %p194, %s191, 31
        %s196 = smul.addr %s195, 4
        %s197 = smul.addr %s193, 128
        %s198 = sadd.s32 %s196, %s197
        %s199 = smul.addr %s198, 8
        %s200 = scalar_lea.vmem %s0, %s199
        %p201 = pneg %p51
        %p202 = pneg %p48
        %p203 = pneg %p72
        %p204 = pneg %p69
        %p205 = pneg %p93
        %p206 = pneg %p90
        %p207 = pneg %p121
        %p208 = pneg %p118
        %s209 = smul.u32 32, %s21
        %p210 = scmp.lt.s32.totalorder %s20, 1
        %s211 = scalar_select %p210, %s20, 1
        %p212 = scmp.lt.s32.totalorder %s209, 31
        %s213 = scalar_select %p212, %s209, 31
        %s214 = smul.addr %s213, 8
        %s215 = smul.addr %s211, 256
        %s216 = sadd.s32 %s214, %s215
        %s217 = smul.addr %s216, 8
        %s218 = scalar_lea.vmem %s3, %s217
        %s219 = smul.u32 32, %s21
        %p220 = scmp.lt.s32.totalorder %s20, 1
        %s221 = scalar_select %p220, %s20, 1
        %p222 = scmp.lt.s32.totalorder %s219, 31
        %s223 = scalar_select %p222, %s219, 31
        %s224 = smul.addr %s223, 4
        %s225 = smul.addr %s221, 128
        %s226 = sadd.s32 %s224, %s225
        %s227 = smul.addr %s226, 8
        %s228 = scalar_lea.vmem %s0, %s227
        %s229 = smul.u32 32, %s21
        %s230 = smul.u32 32, %s21
        %p231 = scmp.lt.s32.totalorder %s20, 1
        %s232 = scalar_select %p231, %s20, 1
        %p233 = scmp.lt.s32.totalorder %s230, 31
        %s234 = scalar_select %p233, %s230, 31
        %s235 = smul.addr %s234, 8
        %s236 = smul.addr %s232, 256
        %s237 = sadd.s32 %s235, %s236
        %s238 = smul.addr %s237, 8
        %s239 = scalar_lea.vmem %s3, %s238
        %s240 = smul.u32 32, %s21
        %v241 = vld [vmem:[%s228] sm:$0xff]
        %v242 = vld [vmem:[%s228 + $0x8] sm:$0xff]
        %v243 = vld [vmem:[%s228 + $0x10] sm:$0xff]
        %v244 = vld [vmem:[%s228 + $0x18] sm:$0xff]
        %v245 = vld [vmem:[%s228 + $0x20] sm:$0xff]
        %v246 = vld [vmem:[%s228 + $0x28] sm:$0xff]
        %v247 = vld [vmem:[%s228 + $0x30] sm:$0xff]
        %v248 = vld [vmem:[%s228 + $0x38] sm:$0xff]
        %v249 = vld [vmem:[%s228 + $0x40] sm:$0xff]
        %v250 = vld [vmem:[%s228 + $0x48] sm:$0xff]
        %v251 = vld [vmem:[%s228 + $0x50] sm:$0xff]
        %v252 = vld [vmem:[%s228 + $0x58] sm:$0xff]
        %v253 = vld [vmem:[%s228 + $0x60] sm:$0xff]
        %v254 = vld [vmem:[%s228 + $0x68] sm:$0xff]
        %v255 = vld [vmem:[%s228 + $0x70] sm:$0xff]
        %v256 = vld [vmem:[%s228 + $0x78] sm:$0xff]
        %v257 = vld [vmem:[%s228 + $0x80] sm:$0xff]
        %v258 = vld [vmem:[%s228 + $0x88] sm:$0xff]
        %v259 = vld [vmem:[%s228 + $0x90] sm:$0xff]
        %v260 = vld [vmem:[%s228 + $0x98] sm:$0xff]
        %v261 = vld [vmem:[%s228 + $0xa0] sm:$0xff]
        %v262 = vld [vmem:[%s228 + $0xa8] sm:$0xff]
        %v263 = vld [vmem:[%s228 + $0xb0] sm:$0xff]
        %v264 = vld [vmem:[%s228 + $0xb8] sm:$0xff]
        %v265 = vld [vmem:[%s228 + $0xc0] sm:$0xff]
        %v266 = vld [vmem:[%s228 + $0xc8] sm:$0xff]
        %v267 = vld [vmem:[%s228 + $0xd0] sm:$0xff]
        %v268 = vld [vmem:[%s228 + $0xd8] sm:$0xff]
        %v269 = vld [vmem:[%s228 + $0xe0] sm:$0xff]
        %v270 = vld [vmem:[%s228 + $0xe8] sm:$0xff]
        %v271 = vld [vmem:[%s228 + $0xf0] sm:$0xff]
        %v272 = vld [vmem:[%s228 + $0xf8] sm:$0xff]
        %v273 = vld [vmem:[%s228 + $0x100] sm:$0xff]
        %v274 = vld [vmem:[%s228 + $0x108] sm:$0xff]
        %v275 = vld [vmem:[%s228 + $0x110] sm:$0xff]
        %v276 = vld [vmem:[%s228 + $0x118] sm:$0xff]
        %v277 = vld [vmem:[%s228 + $0x120] sm:$0xff]
        %v278 = vld [vmem:[%s228 + $0x128] sm:$0xff]
        %v279 = vld [vmem:[%s228 + $0x130] sm:$0xff]
        %v280 = vld [vmem:[%s228 + $0x138] sm:$0xff]
        %v281 = vld [vmem:[%s228 + $0x140] sm:$0xff]
        %v282 = vld [vmem:[%s228 + $0x148] sm:$0xff]
        %v283 = vld [vmem:[%s228 + $0x150] sm:$0xff]
        %v284 = vld [vmem:[%s228 + $0x158] sm:$0xff]
        %v285 = vld [vmem:[%s228 + $0x160] sm:$0xff]
        %v286 = vld [vmem:[%s228 + $0x168] sm:$0xff]
        %v287 = vld [vmem:[%s228 + $0x170] sm:$0xff]
        %v288 = vld [vmem:[%s228 + $0x178] sm:$0xff]
        %v289 = vld [vmem:[%s228 + $0x180] sm:$0xff]
        %v290 = vld [vmem:[%s228 + $0x188] sm:$0xff]
        %v291 = vld [vmem:[%s228 + $0x190] sm:$0xff]
        %v292 = vld [vmem:[%s228 + $0x198] sm:$0xff]
        %v293 = vld [vmem:[%s228 + $0x1a0] sm:$0xff]
        %v294 = vld [vmem:[%s228 + $0x1a8] sm:$0xff]
        %v295 = vld [vmem:[%s228 + $0x1b0] sm:$0xff]
        %v296 = vld [vmem:[%s228 + $0x1b8] sm:$0xff]
        %v297 = vld [vmem:[%s228 + $0x1c0] sm:$0xff]
        %v298 = vld [vmem:[%s228 + $0x1c8] sm:$0xff]
        %v299 = vld [vmem:[%s228 + $0x1d0] sm:$0xff]
        %v300 = vld [vmem:[%s228 + $0x1d8] sm:$0xff]
        %v301 = vld [vmem:[%s228 + $0x1e0] sm:$0xff]
        %v302 = vld [vmem:[%s228 + $0x1e8] sm:$0xff]
        %v303 = vld [vmem:[%s228 + $0x1f0] sm:$0xff]
        %v304 = vld [vmem:[%s228 + $0x1f8] sm:$0xff]
        %v305 = vld [vmem:[%s228 + $0x200] sm:$0xff]
        %v306 = vld [vmem:[%s228 + $0x208] sm:$0xff]
        %v307 = vld [vmem:[%s228 + $0x210] sm:$0xff]
        %v308 = vld [vmem:[%s228 + $0x218] sm:$0xff]
        %v309 = vld [vmem:[%s228 + $0x220] sm:$0xff]
        %v310 = vld [vmem:[%s228 + $0x228] sm:$0xff]
        %v311 = vld [vmem:[%s228 + $0x230] sm:$0xff]
        %v312 = vld [vmem:[%s228 + $0x238] sm:$0xff]
        %v313 = vld [vmem:[%s228 + $0x240] sm:$0xff]
        %v314 = vld [vmem:[%s228 + $0x248] sm:$0xff]
        %v315 = vld [vmem:[%s228 + $0x250] sm:$0xff]
        %v316 = vld [vmem:[%s228 + $0x258] sm:$0xff]
        %v317 = vld [vmem:[%s228 + $0x260] sm:$0xff]
        %v318 = vld [vmem:[%s228 + $0x268] sm:$0xff]
        %v319 = vld [vmem:[%s228 + $0x270] sm:$0xff]
        %v320 = vld [vmem:[%s228 + $0x278] sm:$0xff]
        %v321 = vld [vmem:[%s228 + $0x280] sm:$0xff]
        %v322 = vld [vmem:[%s228 + $0x288] sm:$0xff]
        %v323 = vld [vmem:[%s228 + $0x290] sm:$0xff]
        %v324 = vld [vmem:[%s228 + $0x298] sm:$0xff]
        %v325 = vld [vmem:[%s228 + $0x2a0] sm:$0xff]
        %v326 = vld [vmem:[%s228 + $0x2a8] sm:$0xff]
        %v327 = vld [vmem:[%s228 + $0x2b0] sm:$0xff]
        %v328 = vld [vmem:[%s228 + $0x2b8] sm:$0xff]
        %v329 = vld [vmem:[%s228 + $0x2c0] sm:$0xff]
        %v330 = vld [vmem:[%s228 + $0x2c8] sm:$0xff]
        %v331 = vld [vmem:[%s228 + $0x2d0] sm:$0xff]
        %v332 = vld [vmem:[%s228 + $0x2d8] sm:$0xff]
        %v333 = vld [vmem:[%s228 + $0x2e0] sm:$0xff]
        %v334 = vld [vmem:[%s228 + $0x2e8] sm:$0xff]
        %v335 = vld [vmem:[%s228 + $0x2f0] sm:$0xff]
        %v336 = vld [vmem:[%s228 + $0x2f8] sm:$0xff]
        %v337 = vld [vmem:[%s228 + $0x300] sm:$0xff]
        %v338 = vld [vmem:[%s228 + $0x308] sm:$0xff]
        %v339 = vld [vmem:[%s228 + $0x310] sm:$0xff]
        %v340 = vld [vmem:[%s228 + $0x318] sm:$0xff]
        %v341 = vld [vmem:[%s228 + $0x320] sm:$0xff]
        %v342 = vld [vmem:[%s228 + $0x328] sm:$0xff]
        %v343 = vld [vmem:[%s228 + $0x330] sm:$0xff]
        %v344 = vld [vmem:[%s228 + $0x338] sm:$0xff]
        %v345 = vld [vmem:[%s228 + $0x340] sm:$0xff]
        %v346 = vld [vmem:[%s228 + $0x348] sm:$0xff]
        %v347 = vld [vmem:[%s228 + $0x350] sm:$0xff]
        %v348 = vld [vmem:[%s228 + $0x358] sm:$0xff]
        %v349 = vld [vmem:[%s228 + $0x360] sm:$0xff]
        %v350 = vld [vmem:[%s228 + $0x368] sm:$0xff]
        %v351 = vld [vmem:[%s228 + $0x370] sm:$0xff]
        %v352 = vld [vmem:[%s228 + $0x378] sm:$0xff]
        %v353 = vld [vmem:[%s228 + $0x380] sm:$0xff]
        %v354 = vld [vmem:[%s228 + $0x388] sm:$0xff]
        %v355 = vld [vmem:[%s228 + $0x390] sm:$0xff]
        %v356 = vld [vmem:[%s228 + $0x398] sm:$0xff]
        %v357 = vld [vmem:[%s228 + $0x3a0] sm:$0xff]
        %v358 = vld [vmem:[%s228 + $0x3a8] sm:$0xff]
        %v359 = vld [vmem:[%s228 + $0x3b0] sm:$0xff]
        %v360 = vld [vmem:[%s228 + $0x3b8] sm:$0xff]
        %v361 = vld [vmem:[%s228 + $0x3c0] sm:$0xff]
        %v362 = vld [vmem:[%s228 + $0x3c8] sm:$0xff]
        %v363 = vld [vmem:[%s228 + $0x3d0] sm:$0xff]
        %v364 = vld [vmem:[%s228 + $0x3d8] sm:$0xff]
        %v365 = vld [vmem:[%s228 + $0x3e0] sm:$0xff]
        %v366 = vld [vmem:[%s228 + $0x3e8] sm:$0xff]
        %v367 = vld [vmem:[%s228 + $0x3f0] sm:$0xff]
        %v368 = vld [vmem:[%s228 + $0x3f8] sm:$0xff]
        %v369 = vld [vmem:[#allocation2] sm:$0xff]
        %vm370 = vcmask 64512
        %v372 = vsel %vm370, %v241, 0
        %v375 = vsel %vm370, %v242, 0
        %v378 = vsel %vm370, %v243, 0
        %v381 = vsel %vm370, %v244, 0
        %v384 = vsel %vm370, %v245, 0
        %v387 = vsel %vm370, %v246, 0
        %v390 = vsel %vm370, %v247, 0
        %v393 = vsel %vm370, %v248, 0
        %v396 = vsel %vm370, %v249, 0
        %v399 = vsel %vm370, %v250, 0
        %v402 = vsel %vm370, %v251, 0
        %v405 = vsel %vm370, %v252, 0
        %v408 = vsel %vm370, %v253, 0
        %v411 = vsel %vm370, %v254, 0
        %v414 = vsel %vm370, %v255, 0
        %v417 = vsel %vm370, %v256, 0
        %v420 = vsel %vm370, %v257, 0
        %v423 = vsel %vm370, %v258, 0
        %v426 = vsel %vm370, %v259, 0
        %v429 = vsel %vm370, %v260, 0
        %v432 = vsel %vm370, %v261, 0
        %v435 = vsel %vm370, %v262, 0
        %v438 = vsel %vm370, %v263, 0
        %v441 = vsel %vm370, %v264, 0
        %v444 = vsel %vm370, %v265, 0
        %v447 = vsel %vm370, %v266, 0
        %v450 = vsel %vm370, %v267, 0
        %v453 = vsel %vm370, %v268, 0
        %v456 = vsel %vm370, %v269, 0
        %v459 = vsel %vm370, %v270, 0
        %v462 = vsel %vm370, %v271, 0
        %v465 = vsel %vm370, %v272, 0
        %v468 = vsel %vm370, %v273, 0
        %v471 = vsel %vm370, %v274, 0
        %v474 = vsel %vm370, %v275, 0
        %v477 = vsel %vm370, %v276, 0
        %v480 = vsel %vm370, %v277, 0
        %v483 = vsel %vm370, %v278, 0
        %v486 = vsel %vm370, %v279, 0
        %v489 = vsel %vm370, %v280, 0
        %v492 = vsel %vm370, %v281, 0
        %v495 = vsel %vm370, %v282, 0
        %v498 = vsel %vm370, %v283, 0
        %v501 = vsel %vm370, %v284, 0
        %v504 = vsel %vm370, %v285, 0
        %v507 = vsel %vm370, %v286, 0
        %v510 = vsel %vm370, %v287, 0
        %v513 = vsel %vm370, %v288, 0
        %v516 = vsel %vm370, %v289, 0
        %v519 = vsel %vm370, %v290, 0
        %v522 = vsel %vm370, %v291, 0
        %v525 = vsel %vm370, %v292, 0
        %v528 = vsel %vm370, %v293, 0
        %v531 = vsel %vm370, %v294, 0
        %v534 = vsel %vm370, %v295, 0
        %v537 = vsel %vm370, %v296, 0
        %v540 = vsel %vm370, %v297, 0
        %v543 = vsel %vm370, %v298, 0
        %v546 = vsel %vm370, %v299, 0
        %v549 = vsel %vm370, %v300, 0
        %v552 = vsel %vm370, %v301, 0
        %v555 = vsel %vm370, %v302, 0
        %v558 = vsel %vm370, %v303, 0
        %v561 = vsel %vm370, %v304, 0
        %v564 = vsel %vm370, %v305, 0
        %v567 = vsel %vm370, %v306, 0
        %v570 = vsel %vm370, %v307, 0
        %v573 = vsel %vm370, %v308, 0
        %v576 = vsel %vm370, %v309, 0
        %v579 = vsel %vm370, %v310, 0
        %v582 = vsel %vm370, %v311, 0
        %v585 = vsel %vm370, %v312, 0
        %v588 = vsel %vm370, %v313, 0
        %v591 = vsel %vm370, %v314, 0
        %v594 = vsel %vm370, %v315, 0
        %v597 = vsel %vm370, %v316, 0
        %v600 = vsel %vm370, %v317, 0
        %v603 = vsel %vm370, %v318, 0
        %v606 = vsel %vm370, %v319, 0
        %v609 = vsel %vm370, %v320, 0
        %v612 = vsel %vm370, %v321, 0
        %v615 = vsel %vm370, %v322, 0
        %v618 = vsel %vm370, %v323, 0
        %v621 = vsel %vm370, %v324, 0
        %v624 = vsel %vm370, %v325, 0
        %v627 = vsel %vm370, %v326, 0
        %v630 = vsel %vm370, %v327, 0
        %v633 = vsel %vm370, %v328, 0
        %v636 = vsel %vm370, %v329, 0
        %v639 = vsel %vm370, %v330, 0
        %v642 = vsel %vm370, %v331, 0
        %v645 = vsel %vm370, %v332, 0
        %v648 = vsel %vm370, %v333, 0
        %v651 = vsel %vm370, %v334, 0
        %v654 = vsel %vm370, %v335, 0
        %v657 = vsel %vm370, %v336, 0
        %v660 = vsel %vm370, %v337, 0
        %v663 = vsel %vm370, %v338, 0
        %v666 = vsel %vm370, %v339, 0
        %v669 = vsel %vm370, %v340, 0
        %v672 = vsel %vm370, %v341, 0
        %v675 = vsel %vm370, %v342, 0
        %v678 = vsel %vm370, %v343, 0
        %v681 = vsel %vm370, %v344, 0
        %v684 = vsel %vm370, %v345, 0
        %v687 = vsel %vm370, %v346, 0
        %v690 = vsel %vm370, %v347, 0
        %v693 = vsel %vm370, %v348, 0
        %v696 = vsel %vm370, %v349, 0
        %v699 = vsel %vm370, %v350, 0
        %v702 = vsel %vm370, %v351, 0
        %v705 = vsel %vm370, %v352, 0
        %v708 = vsel %vm370, %v353, 0
        %v711 = vsel %vm370, %v354, 0
        %v714 = vsel %vm370, %v355, 0
        %v717 = vsel %vm370, %v356, 0
        %v720 = vsel %vm370, %v357, 0
        %v723 = vsel %vm370, %v358, 0
        %v726 = vsel %vm370, %v359, 0
        %v729 = vsel %vm370, %v360, 0
        %v732 = vsel %vm370, %v361, 0
        %v735 = vsel %vm370, %v362, 0
        %v738 = vsel %vm370, %v363, 0
        %v741 = vsel %vm370, %v364, 0
        %v744 = vsel %vm370, %v365, 0
        %v747 = vsel %vm370, %v366, 0
        %v750 = vsel %vm370, %v367, 0
        %v753 = vsel %vm370, %v368, 0
        %755 = vmatprep.subr.mxu0 0.0
        %756 = vmatpush1.msra.mxu0 0.0
        %757 = vmatprep.subr.mxu0 0.0
        %758 = vmatpush1.msra.mxu0 0.0
        %759 = vmatprep.subr.mxu0 0.0
        %760 = vmatpush1.msra.mxu0 0.0
        %761 = vmatprep.subr.mxu0 0.0
        %762 = vmatpush1.msra.mxu0 0.0
        %763 = vmatprep.subr.mxu0 0.0
        %764 = vmatpush1.msra.mxu0 0.0
        %765 = vmatprep.subr.mxu0 0.0
        %766 = vmatpush1.msra.mxu0 0.0
        %767 = vmatprep.subr.mxu0 0.0
        %768 = vmatpush1.msra.mxu0 0.0
        %769 = vmatprep.subr.mxu0 0.0
        %770 = vmatpush1.msra.mxu0 0.0
        %771 = vmatprep.subr.mxu0 0.0
        %772 = vmatpush1.msra.mxu0 0.0
        %773 = vmatprep.subr.mxu0 0.0
        %774 = vmatpush1.msra.mxu0 0.0
        %775 = vmatprep.subr.mxu0 0.0
        %776 = vmatpush1.msra.mxu0 0.0
        %777 = vmatprep.subr.mxu0 0.0
        %778 = vmatpush1.msra.mxu0 0.0
        %779 = vmatprep.subr.mxu0 0.0
        %780 = vmatpush1.msra.mxu0 0.0
        %781 = vmatprep.subr.mxu0 0.0
        %782 = vmatpush1.msra.mxu0 0.0
        %783 = vmatprep.subr.mxu0 0.0
        %784 = vmatpush1.msra.mxu0 0.0
        %785 = vmatprep.subr.mxu0 0.0
        %786 = vmatpush1.msra.mxu0 %v369
        %787 = vmatprep.subr.mxu0 0.0
        %788 = vmatpush2.msra.mxu0 0.0
        %789 = vmatprep.subr.mxu0 0.0
        %790 = vmatpush2.msra.mxu0 0.0
        %791 = vmatprep.subr.mxu0 0.0
        %792 = vmatpush2.msra.mxu0 0.0
        %793 = vmatprep.subr.mxu0 0.0
        %794 = vmatpush2.msra.mxu0 0.0
        %795 = vmatprep.subr.mxu0 0.0
        %796 = vmatpush2.msra.mxu0 0.0
        %797 = vmatprep.subr.mxu0 0.0
        %798 = vmatpush2.msra.mxu0 0.0
        %799 = vmatprep.subr.mxu0 0.0
        %800 = vmatpush2.msra.mxu0 0.0
        %801 = vmatprep.subr.mxu0 0.0
        %802 = vmatpush2.msra.mxu0 0.0
        %803 = vmatprep.subr.mxu0 0.0
        %804 = vmatpush2.msra.mxu0 0.0
        %805 = vmatprep.subr.mxu0 0.0
        %806 = vmatpush2.msra.mxu0 0.0
        %807 = vmatprep.subr.mxu0 0.0
        %808 = vmatpush2.msra.mxu0 0.0
        %809 = vmatprep.subr.mxu0 0.0
        %810 = vmatpush2.msra.mxu0 0.0
        %811 = vmatprep.subr.mxu0 0.0
        %812 = vmatpush2.msra.mxu0 0.0
        %813 = vmatprep.subr.mxu0 0.0
        %814 = vmatpush2.msra.mxu0 0.0
        %815 = vmatprep.subr.mxu0 0.0
        %816 = vmatpush2.msra.mxu0 0.0
        %817 = vmatprep.subr.mxu0 0.0
        %818 = vmatpush2.msra.mxu0 0.0
        %819 = vmatprep.mubr.f32.mxu0 0.0
        %820 = vmatmul.mubr.f32.gmra.mxu0 %v372
        %v821 = vpop.f32.mrf.mxu0
        %v822 = vadd.f32 0.0, %v821
        %v823 = vpop.f32.mrf.mxu0
        %824 = vmatprep.mubr.f32.mxu0 0.0
        %825 = vmatmul.mubr.f32.gmra.mxu0 %v375
        %v826 = vpop.f32.mrf.mxu0
        %v827 = vadd.f32 0.0, %v826
        %v828 = vpop.f32.mrf.mxu0
        %829 = vmatprep.mubr.f32.mxu0 0.0
        %830 = vmatmul.mubr.f32.gmra.mxu0 %v378
        %v831 = vpop.f32.mrf.mxu0
        %v832 = vadd.f32 0.0, %v831
        %v833 = vpop.f32.mrf.mxu0
        %834 = vmatprep.mubr.f32.mxu0 0.0
        %835 = vmatmul.mubr.f32.gmra.mxu0 %v381
        %v836 = vpop.f32.mrf.mxu0
        %v837 = vadd.f32 0.0, %v836
        %v838 = vpop.f32.mrf.mxu0
        %839 = vmatprep.mubr.f32.mxu0 0.0
        %840 = vmatmul.mubr.f32.gmra.mxu0 %v384
        %v841 = vpop.f32.mrf.mxu0
        %v842 = vadd.f32 0.0, %v841
        %v843 = vpop.f32.mrf.mxu0
        %844 = vmatprep.mubr.f32.mxu0 0.0
        %845 = vmatmul.mubr.f32.gmra.mxu0 %v387
        %v846 = vpop.f32.mrf.mxu0
        %v847 = vadd.f32 0.0, %v846
        %v848 = vpop.f32.mrf.mxu0
        %849 = vmatprep.mubr.f32.mxu0 0.0
        %850 = vmatmul.mubr.f32.gmra.mxu0 %v390
        %v851 = vpop.f32.mrf.mxu0
        %v852 = vadd.f32 0.0, %v851
        %v853 = vpop.f32.mrf.mxu0
        %854 = vmatprep.mubr.f32.mxu0 0.0
        %855 = vmatmul.mubr.f32.gmra.mxu0 %v393
        %v856 = vpop.f32.mrf.mxu0
        %v857 = vadd.f32 0.0, %v856
        %v858 = vpop.f32.mrf.mxu0
        %859 = vmatprep.mubr.f32.mxu0 0.0
        %860 = vmatmul.mubr.f32.gmra.mxu0 %v396
        %v861 = vpop.f32.mrf.mxu0
        %v862 = vadd.f32 0.0, %v861
        %v863 = vpop.f32.mrf.mxu0
        %864 = vmatprep.mubr.f32.mxu0 0.0
        %865 = vmatmul.mubr.f32.gmra.mxu0 %v399
        %v866 = vpop.f32.mrf.mxu0
        %v867 = vadd.f32 0.0, %v866
        %v868 = vpop.f32.mrf.mxu0
        %869 = vmatprep.mubr.f32.mxu0 0.0
        %870 = vmatmul.mubr.f32.gmra.mxu0 %v402
        %v871 = vpop.f32.mrf.mxu0
        %v872 = vadd.f32 0.0, %v871
        %v873 = vpop.f32.mrf.mxu0
        %874 = vmatprep.mubr.f32.mxu0 0.0
        %875 = vmatmul.mubr.f32.gmra.mxu0 %v405
        %v876 = vpop.f32.mrf.mxu0
        %v877 = vadd.f32 0.0, %v876
        %v878 = vpop.f32.mrf.mxu0
        %879 = vmatprep.mubr.f32.mxu0 0.0
        %880 = vmatmul.mubr.f32.gmra.mxu0 %v408
        %v881 = vpop.f32.mrf.mxu0
        %v882 = vadd.f32 0.0, %v881
        %v883 = vpop.f32.mrf.mxu0
        %884 = vmatprep.mubr.f32.mxu0 0.0
        %885 = vmatmul.mubr.f32.gmra.mxu0 %v411
        %v886 = vpop.f32.mrf.mxu0
        %v887 = vadd.f32 0.0, %v886
        %v888 = vpop.f32.mrf.mxu0
        %889 = vmatprep.mubr.f32.mxu0 0.0
        %890 = vmatmul.mubr.f32.gmra.mxu0 %v414
        %v891 = vpop.f32.mrf.mxu0
        %v892 = vadd.f32 0.0, %v891
        %v893 = vpop.f32.mrf.mxu0
        %894 = vmatprep.mubr.f32.mxu0 0.0
        %895 = vmatmul.mubr.f32.gmra.mxu0 %v417
        %v896 = vpop.f32.mrf.mxu0
        %v897 = vadd.f32 0.0, %v896
        %v898 = vpop.f32.mrf.mxu0
        %899 = vmatprep.mubr.f32.mxu0 0.0
        %900 = vmatmul.mubr.f32.gmra.mxu0 %v420
        %v901 = vpop.f32.mrf.mxu0
        %v902 = vadd.f32 0.0, %v901
        %v903 = vpop.f32.mrf.mxu0
        %904 = vmatprep.mubr.f32.mxu0 0.0
        %905 = vmatmul.mubr.f32.gmra.mxu0 %v423
        %v906 = vpop.f32.mrf.mxu0
        %v907 = vadd.f32 0.0, %v906
        %v908 = vpop.f32.mrf.mxu0
        %909 = vmatprep.mubr.f32.mxu0 0.0
        %910 = vmatmul.mubr.f32.gmra.mxu0 %v426
        %v911 = vpop.f32.mrf.mxu0
        %v912 = vadd.f32 0.0, %v911
        %v913 = vpop.f32.mrf.mxu0
        %914 = vmatprep.mubr.f32.mxu0 0.0
        %915 = vmatmul.mubr.f32.gmra.mxu0 %v429
        %v916 = vpop.f32.mrf.mxu0
        %v917 = vadd.f32 0.0, %v916
        %v918 = vpop.f32.mrf.mxu0
        %919 = vmatprep.mubr.f32.mxu0 0.0
        %920 = vmatmul.mubr.f32.gmra.mxu0 %v432
        %v921 = vpop.f32.mrf.mxu0
        %v922 = vadd.f32 0.0, %v921
        %v923 = vpop.f32.mrf.mxu0
        %924 = vmatprep.mubr.f32.mxu0 0.0
        %925 = vmatmul.mubr.f32.gmra.mxu0 %v435
        %v926 = vpop.f32.mrf.mxu0
        %v927 = vadd.f32 0.0, %v926
        %v928 = vpop.f32.mrf.mxu0
        %929 = vmatprep.mubr.f32.mxu0 0.0
        %930 = vmatmul.mubr.f32.gmra.mxu0 %v438
        %v931 = vpop.f32.mrf.mxu0
        %v932 = vadd.f32 0.0, %v931
        %v933 = vpop.f32.mrf.mxu0
        %934 = vmatprep.mubr.f32.mxu0 0.0
        %935 = vmatmul.mubr.f32.gmra.mxu0 %v441
        %v936 = vpop.f32.mrf.mxu0
        %v937 = vadd.f32 0.0, %v936
        %v938 = vpop.f32.mrf.mxu0
        %939 = vmatprep.mubr.f32.mxu0 0.0
        %940 = vmatmul.mubr.f32.gmra.mxu0 %v444
        %v941 = vpop.f32.mrf.mxu0
        %v942 = vadd.f32 0.0, %v941
        %v943 = vpop.f32.mrf.mxu0
        %944 = vmatprep.mubr.f32.mxu0 0.0
        %945 = vmatmul.mubr.f32.gmra.mxu0 %v447
        %v946 = vpop.f32.mrf.mxu0
        %v947 = vadd.f32 0.0, %v946
        %v948 = vpop.f32.mrf.mxu0
        %949 = vmatprep.mubr.f32.mxu0 0.0
        %950 = vmatmul.mubr.f32.gmra.mxu0 %v450
        %v951 = vpop.f32.mrf.mxu0
        %v952 = vadd.f32 0.0, %v951
        %v953 = vpop.f32.mrf.mxu0
        %954 = vmatprep.mubr.f32.mxu0 0.0
        %955 = vmatmul.mubr.f32.gmra.mxu0 %v453
        %v956 = vpop.f32.mrf.mxu0
        %v957 = vadd.f32 0.0, %v956
        %v958 = vpop.f32.mrf.mxu0
        %959 = vmatprep.mubr.f32.mxu0 0.0
        %960 = vmatmul.mubr.f32.gmra.mxu0 %v456
        %v961 = vpop.f32.mrf.mxu0
        %v962 = vadd.f32 0.0, %v961
        %v963 = vpop.f32.mrf.mxu0
        %964 = vmatprep.mubr.f32.mxu0 0.0
        %965 = vmatmul.mubr.f32.gmra.mxu0 %v459
        %v966 = vpop.f32.mrf.mxu0
        %v967 = vadd.f32 0.0, %v966
        %v968 = vpop.f32.mrf.mxu0
        %969 = vmatprep.mubr.f32.mxu0 0.0
        %970 = vmatmul.mubr.f32.gmra.mxu0 %v462
        %v971 = vpop.f32.mrf.mxu0
        %v972 = vadd.f32 0.0, %v971
        %v973 = vpop.f32.mrf.mxu0
        %974 = vmatprep.mubr.f32.mxu0 0.0
        %975 = vmatmul.mubr.f32.gmra.mxu0 %v465
        %v976 = vpop.f32.mrf.mxu0
        %v977 = vadd.f32 0.0, %v976
        %v978 = vpop.f32.mrf.mxu0
        %979 = vmatprep.mubr.f32.mxu0 0.0
        %980 = vmatmul.mubr.f32.gmra.mxu0 %v468
        %v981 = vpop.f32.mrf.mxu0
        %v982 = vadd.f32 0.0, %v981
        %v983 = vpop.f32.mrf.mxu0
        %984 = vmatprep.mubr.f32.mxu0 0.0
        %985 = vmatmul.mubr.f32.gmra.mxu0 %v471
        %v986 = vpop.f32.mrf.mxu0
        %v987 = vadd.f32 0.0, %v986
        %v988 = vpop.f32.mrf.mxu0
        %989 = vmatprep.mubr.f32.mxu0 0.0
        %990 = vmatmul.mubr.f32.gmra.mxu0 %v474
        %v991 = vpop.f32.mrf.mxu0
        %v992 = vadd.f32 0.0, %v991
        %v993 = vpop.f32.mrf.mxu0
        %994 = vmatprep.mubr.f32.mxu0 0.0
        %995 = vmatmul.mubr.f32.gmra.mxu0 %v477
        %v996 = vpop.f32.mrf.mxu0
        %v997 = vadd.f32 0.0, %v996
        %v998 = vpop.f32.mrf.mxu0
        %999 = vmatprep.mubr.f32.mxu0 0.0
        %1000 = vmatmul.mubr.f32.gmra.mxu0 %v480
        %v1001 = vpop.f32.mrf.mxu0
        %v1002 = vadd.f32 0.0, %v1001
        %v1003 = vpop.f32.mrf.mxu0
        %1004 = vmatprep.mubr.f32.mxu0 0.0
        %1005 = vmatmul.mubr.f32.gmra.mxu0 %v483
        %v1006 = vpop.f32.mrf.mxu0
        %v1007 = vadd.f32 0.0, %v1006
        %v1008 = vpop.f32.mrf.mxu0
        %1009 = vmatprep.mubr.f32.mxu0 0.0
        %1010 = vmatmul.mubr.f32.gmra.mxu0 %v486
        %v1011 = vpop.f32.mrf.mxu0
        %v1012 = vadd.f32 0.0, %v1011
        %v1013 = vpop.f32.mrf.mxu0
        %1014 = vmatprep.mubr.f32.mxu0 0.0
        %1015 = vmatmul.mubr.f32.gmra.mxu0 %v489
        %v1016 = vpop.f32.mrf.mxu0
        %v1017 = vadd.f32 0.0, %v1016
        %v1018 = vpop.f32.mrf.mxu0
        %1019 = vmatprep.mubr.f32.mxu0 0.0
        %1020 = vmatmul.mubr.f32.gmra.mxu0 %v492
        %v1021 = vpop.f32.mrf.mxu0
        %v1022 = vadd.f32 0.0, %v1021
        %v1023 = vpop.f32.mrf.mxu0
        %1024 = vmatprep.mubr.f32.mxu0 0.0
        %1025 = vmatmul.mubr.f32.gmra.mxu0 %v495
        %v1026 = vpop.f32.mrf.mxu0
        %v1027 = vadd.f32 0.0, %v1026
        %v1028 = vpop.f32.mrf.mxu0
        %1029 = vmatprep.mubr.f32.mxu0 0.0
        %1030 = vmatmul.mubr.f32.gmra.mxu0 %v498
        %v1031 = vpop.f32.mrf.mxu0
        %v1032 = vadd.f32 0.0, %v1031
        %v1033 = vpop.f32.mrf.mxu0
        %1034 = vmatprep.mubr.f32.mxu0 0.0
        %1035 = vmatmul.mubr.f32.gmra.mxu0 %v501
        %v1036 = vpop.f32.mrf.mxu0
        %v1037 = vadd.f32 0.0, %v1036
        %v1038 = vpop.f32.mrf.mxu0
        %1039 = vmatprep.mubr.f32.mxu0 0.0
        %1040 = vmatmul.mubr.f32.gmra.mxu0 %v504
        %v1041 = vpop.f32.mrf.mxu0
        %v1042 = vadd.f32 0.0, %v1041
        %v1043 = vpop.f32.mrf.mxu0
        %1044 = vmatprep.mubr.f32.mxu0 0.0
        %1045 = vmatmul.mubr.f32.gmra.mxu0 %v507
        %v1046 = vpop.f32.mrf.mxu0
        %v1047 = vadd.f32 0.0, %v1046
        %v1048 = vpop.f32.mrf.mxu0
        %1049 = vmatprep.mubr.f32.mxu0 0.0
        %1050 = vmatmul.mubr.f32.gmra.mxu0 %v510
        %v1051 = vpop.f32.mrf.mxu0
        %v1052 = vadd.f32 0.0, %v1051
        %v1053 = vpop.f32.mrf.mxu0
        %1054 = vmatprep.mubr.f32.mxu0 0.0
        %1055 = vmatmul.mubr.f32.gmra.mxu0 %v513
        %v1056 = vpop.f32.mrf.mxu0
        %v1057 = vadd.f32 0.0, %v1056
        %v1058 = vpop.f32.mrf.mxu0
        %1059 = vmatprep.mubr.f32.mxu0 0.0
        %1060 = vmatmul.mubr.f32.gmra.mxu0 %v516
        %v1061 = vpop.f32.mrf.mxu0
        %v1062 = vadd.f32 0.0, %v1061
        %v1063 = vpop.f32.mrf.mxu0
        %1064 = vmatprep.mubr.f32.mxu0 0.0
        %1065 = vmatmul.mubr.f32.gmra.mxu0 %v519
        %v1066 = vpop.f32.mrf.mxu0
        %v1067 = vadd.f32 0.0, %v1066
        %v1068 = vpop.f32.mrf.mxu0
        %1069 = vmatprep.mubr.f32.mxu0 0.0
        %1070 = vmatmul.mubr.f32.gmra.mxu0 %v522
        %v1071 = vpop.f32.mrf.mxu0
        %v1072 = vadd.f32 0.0, %v1071
        %v1073 = vpop.f32.mrf.mxu0
        %1074 = vmatprep.mubr.f32.mxu0 0.0
        %1075 = vmatmul.mubr.f32.gmra.mxu0 %v525
        %v1076 = vpop.f32.mrf.mxu0
        %v1077 = vadd.f32 0.0, %v1076
        %v1078 = vpop.f32.mrf.mxu0
        %1079 = vmatprep.mubr.f32.mxu0 0.0
        %1080 = vmatmul.mubr.f32.gmra.mxu0 %v528
        %v1081 = vpop.f32.mrf.mxu0
        %v1082 = vadd.f32 0.0, %v1081
        %v1083 = vpop.f32.mrf.mxu0
        %1084 = vmatprep.mubr.f32.mxu0 0.0
        %1085 = vmatmul.mubr.f32.gmra.mxu0 %v531
        %v1086 = vpop.f32.mrf.mxu0
        %v1087 = vadd.f32 0.0, %v1086
        %v1088 = vpop.f32.mrf.mxu0
        %1089 = vmatprep.mubr.f32.mxu0 0.0
        %1090 = vmatmul.mubr.f32.gmra.mxu0 %v534
        %v1091 = vpop.f32.mrf.mxu0
        %v1092 = vadd.f32 0.0, %v1091
        %v1093 = vpop.f32.mrf.mxu0
        %1094 = vmatprep.mubr.f32.mxu0 0.0
        %1095 = vmatmul.mubr.f32.gmra.mxu0 %v537
        %v1096 = vpop.f32.mrf.mxu0
        %v1097 = vadd.f32 0.0, %v1096
        %v1098 = vpop.f32.mrf.mxu0
        %1099 = vmatprep.mubr.f32.mxu0 0.0
        %1100 = vmatmul.mubr.f32.gmra.mxu0 %v540
        %v1101 = vpop.f32.mrf.mxu0
        %v1102 = vadd.f32 0.0, %v1101
        %v1103 = vpop.f32.mrf.mxu0
        %1104 = vmatprep.mubr.f32.mxu0 0.0
        %1105 = vmatmul.mubr.f32.gmra.mxu0 %v543
        %v1106 = vpop.f32.mrf.mxu0
        %v1107 = vadd.f32 0.0, %v1106
        %v1108 = vpop.f32.mrf.mxu0
        %1109 = vmatprep.mubr.f32.mxu0 0.0
        %1110 = vmatmul.mubr.f32.gmra.mxu0 %v546
        %v1111 = vpop.f32.mrf.mxu0
        %v1112 = vadd.f32 0.0, %v1111
        %v1113 = vpop.f32.mrf.mxu0
        %1114 = vmatprep.mubr.f32.mxu0 0.0
        %1115 = vmatmul.mubr.f32.gmra.mxu0 %v549
        %v1116 = vpop.f32.mrf.mxu0
        %v1117 = vadd.f32 0.0, %v1116
        %v1118 = vpop.f32.mrf.mxu0
        %1119 = vmatprep.mubr.f32.mxu0 0.0
        %1120 = vmatmul.mubr.f32.gmra.mxu0 %v552
        %v1121 = vpop.f32.mrf.mxu0
        %v1122 = vadd.f32 0.0, %v1121
        %v1123 = vpop.f32.mrf.mxu0
        %1124 = vmatprep.mubr.f32.mxu0 0.0
        %1125 = vmatmul.mubr.f32.gmra.mxu0 %v555
        %v1126 = vpop.f32.mrf.mxu0
        %v1127 = vadd.f32 0.0, %v1126
        %v1128 = vpop.f32.mrf.mxu0
        %1129 = vmatprep.mubr.f32.mxu0 0.0
        %1130 = vmatmul.mubr.f32.gmra.mxu0 %v558
        %v1131 = vpop.f32.mrf.mxu0
        %v1132 = vadd.f32 0.0, %v1131
        %v1133 = vpop.f32.mrf.mxu0
        %1134 = vmatprep.mubr.f32.mxu0 0.0
        %1135 = vmatmul.mubr.f32.gmra.mxu0 %v561
        %v1136 = vpop.f32.mrf.mxu0
        %v1137 = vadd.f32 0.0, %v1136
        %v1138 = vpop.f32.mrf.mxu0
        %1139 = vmatprep.mubr.f32.mxu0 0.0
        %1140 = vmatmul.mubr.f32.gmra.mxu0 %v564
        %v1141 = vpop.f32.mrf.mxu0
        %v1142 = vadd.f32 0.0, %v1141
        %v1143 = vpop.f32.mrf.mxu0
        %1144 = vmatprep.mubr.f32.mxu0 0.0
        %1145 = vmatmul.mubr.f32.gmra.mxu0 %v567
        %v1146 = vpop.f32.mrf.mxu0
        %v1147 = vadd.f32 0.0, %v1146
        %v1148 = vpop.f32.mrf.mxu0
        %1149 = vmatprep.mubr.f32.mxu0 0.0
        %1150 = vmatmul.mubr.f32.gmra.mxu0 %v570
        %v1151 = vpop.f32.mrf.mxu0
        %v1152 = vadd.f32 0.0, %v1151
        %v1153 = vpop.f32.mrf.mxu0
        %1154 = vmatprep.mubr.f32.mxu0 0.0
        %1155 = vmatmul.mubr.f32.gmra.mxu0 %v573
        %v1156 = vpop.f32.mrf.mxu0
        %v1157 = vadd.f32 0.0, %v1156
        %v1158 = vpop.f32.mrf.mxu0
        %1159 = vmatprep.mubr.f32.mxu0 0.0
        %1160 = vmatmul.mubr.f32.gmra.mxu0 %v576
        %v1161 = vpop.f32.mrf.mxu0
        %v1162 = vadd.f32 0.0, %v1161
        %v1163 = vpop.f32.mrf.mxu0
        %1164 = vmatprep.mubr.f32.mxu0 0.0
        %1165 = vmatmul.mubr.f32.gmra.mxu0 %v579
        %v1166 = vpop.f32.mrf.mxu0
        %v1167 = vadd.f32 0.0, %v1166
        %v1168 = vpop.f32.mrf.mxu0
        %1169 = vmatprep.mubr.f32.mxu0 0.0
        %1170 = vmatmul.mubr.f32.gmra.mxu0 %v582
        %v1171 = vpop.f32.mrf.mxu0
        %v1172 = vadd.f32 0.0, %v1171
        %v1173 = vpop.f32.mrf.mxu0
        %1174 = vmatprep.mubr.f32.mxu0 0.0
        %1175 = vmatmul.mubr.f32.gmra.mxu0 %v585
        %v1176 = vpop.f32.mrf.mxu0
        %v1177 = vadd.f32 0.0, %v1176
        %v1178 = vpop.f32.mrf.mxu0
        %1179 = vmatprep.mubr.f32.mxu0 0.0
        %1180 = vmatmul.mubr.f32.gmra.mxu0 %v588
        %v1181 = vpop.f32.mrf.mxu0
        %v1182 = vadd.f32 0.0, %v1181
        %v1183 = vpop.f32.mrf.mxu0
        %1184 = vmatprep.mubr.f32.mxu0 0.0
        %1185 = vmatmul.mubr.f32.gmra.mxu0 %v591
        %v1186 = vpop.f32.mrf.mxu0
        %v1187 = vadd.f32 0.0, %v1186
        %v1188 = vpop.f32.mrf.mxu0
        %1189 = vmatprep.mubr.f32.mxu0 0.0
        %1190 = vmatmul.mubr.f32.gmra.mxu0 %v594
        %v1191 = vpop.f32.mrf.mxu0
        %v1192 = vadd.f32 0.0, %v1191
        %v1193 = vpop.f32.mrf.mxu0
        %1194 = vmatprep.mubr.f32.mxu0 0.0
        %1195 = vmatmul.mubr.f32.gmra.mxu0 %v597
        %v1196 = vpop.f32.mrf.mxu0
        %v1197 = vadd.f32 0.0, %v1196
        %v1198 = vpop.f32.mrf.mxu0
        %1199 = vmatprep.mubr.f32.mxu0 0.0
        %1200 = vmatmul.mubr.f32.gmra.mxu0 %v600
        %v1201 = vpop.f32.mrf.mxu0
        %v1202 = vadd.f32 0.0, %v1201
        %v1203 = vpop.f32.mrf.mxu0
        %1204 = vmatprep.mubr.f32.mxu0 0.0
        %1205 = vmatmul.mubr.f32.gmra.mxu0 %v603
        %v1206 = vpop.f32.mrf.mxu0
        %v1207 = vadd.f32 0.0, %v1206
        %v1208 = vpop.f32.mrf.mxu0
        %1209 = vmatprep.mubr.f32.mxu0 0.0
        %1210 = vmatmul.mubr.f32.gmra.mxu0 %v606
        %v1211 = vpop.f32.mrf.mxu0
        %v1212 = vadd.f32 0.0, %v1211
        %v1213 = vpop.f32.mrf.mxu0
        %1214 = vmatprep.mubr.f32.mxu0 0.0
        %1215 = vmatmul.mubr.f32.gmra.mxu0 %v609
        %v1216 = vpop.f32.mrf.mxu0
        %v1217 = vadd.f32 0.0, %v1216
        %v1218 = vpop.f32.mrf.mxu0
        %1219 = vmatprep.mubr.f32.mxu0 0.0
        %1220 = vmatmul.mubr.f32.gmra.mxu0 %v612
        %v1221 = vpop.f32.mrf.mxu0
        %v1222 = vadd.f32 0.0, %v1221
        %v1223 = vpop.f32.mrf.mxu0
        %1224 = vmatprep.mubr.f32.mxu0 0.0
        %1225 = vmatmul.mubr.f32.gmra.mxu0 %v615
        %v1226 = vpop.f32.mrf.mxu0
        %v1227 = vadd.f32 0.0, %v1226
        %v1228 = vpop.f32.mrf.mxu0
        %1229 = vmatprep.mubr.f32.mxu0 0.0
        %1230 = vmatmul.mubr.f32.gmra.mxu0 %v618
        %v1231 = vpop.f32.mrf.mxu0
        %v1232 = vadd.f32 0.0, %v1231
        %v1233 = vpop.f32.mrf.mxu0
        %1234 = vmatprep.mubr.f32.mxu0 0.0
        %1235 = vmatmul.mubr.f32.gmra.mxu0 %v621
        %v1236 = vpop.f32.mrf.mxu0
        %v1237 = vadd.f32 0.0, %v1236
        %v1238 = vpop.f32.mrf.mxu0
        %1239 = vmatprep.mubr.f32.mxu0 0.0
        %1240 = vmatmul.mubr.f32.gmra.mxu0 %v624
        %v1241 = vpop.f32.mrf.mxu0
        %v1242 = vadd.f32 0.0, %v1241
        %v1243 = vpop.f32.mrf.mxu0
        %1244 = vmatprep.mubr.f32.mxu0 0.0
        %1245 = vmatmul.mubr.f32.gmra.mxu0 %v627
        %v1246 = vpop.f32.mrf.mxu0
        %v1247 = vadd.f32 0.0, %v1246
        %v1248 = vpop.f32.mrf.mxu0
        %1249 = vmatprep.mubr.f32.mxu0 0.0
        %1250 = vmatmul.mubr.f32.gmra.mxu0 %v630
        %v1251 = vpop.f32.mrf.mxu0
        %v1252 = vadd.f32 0.0, %v1251
        %v1253 = vpop.f32.mrf.mxu0
        %1254 = vmatprep.mubr.f32.mxu0 0.0
        %1255 = vmatmul.mubr.f32.gmra.mxu0 %v633
        %v1256 = vpop.f32.mrf.mxu0
        %v1257 = vadd.f32 0.0, %v1256
        %v1258 = vpop.f32.mrf.mxu0
        %1259 = vmatprep.mubr.f32.mxu0 0.0
        %1260 = vmatmul.mubr.f32.gmra.mxu0 %v636
        %v1261 = vpop.f32.mrf.mxu0
        %v1262 = vadd.f32 0.0, %v1261
        %v1263 = vpop.f32.mrf.mxu0
        %1264 = vmatprep.mubr.f32.mxu0 0.0
        %1265 = vmatmul.mubr.f32.gmra.mxu0 %v639
        %v1266 = vpop.f32.mrf.mxu0
        %v1267 = vadd.f32 0.0, %v1266
        %v1268 = vpop.f32.mrf.mxu0
        %1269 = vmatprep.mubr.f32.mxu0 0.0
        %1270 = vmatmul.mubr.f32.gmra.mxu0 %v642
        %v1271 = vpop.f32.mrf.mxu0
        %v1272 = vadd.f32 0.0, %v1271
        %v1273 = vpop.f32.mrf.mxu0
        %1274 = vmatprep.mubr.f32.mxu0 0.0
        %1275 = vmatmul.mubr.f32.gmra.mxu0 %v645
        %v1276 = vpop.f32.mrf.mxu0
        %v1277 = vadd.f32 0.0, %v1276
        %v1278 = vpop.f32.mrf.mxu0
        %1279 = vmatprep.mubr.f32.mxu0 0.0
        %1280 = vmatmul.mubr.f32.gmra.mxu0 %v648
        %v1281 = vpop.f32.mrf.mxu0
        %v1282 = vadd.f32 0.0, %v1281
        %v1283 = vpop.f32.mrf.mxu0
        %1284 = vmatprep.mubr.f32.mxu0 0.0
        %1285 = vmatmul.mubr.f32.gmra.mxu0 %v651
        %v1286 = vpop.f32.mrf.mxu0
        %v1287 = vadd.f32 0.0, %v1286
        %v1288 = vpop.f32.mrf.mxu0
        %1289 = vmatprep.mubr.f32.mxu0 0.0
        %1290 = vmatmul.mubr.f32.gmra.mxu0 %v654
        %v1291 = vpop.f32.mrf.mxu0
        %v1292 = vadd.f32 0.0, %v1291
        %v1293 = vpop.f32.mrf.mxu0
        %1294 = vmatprep.mubr.f32.mxu0 0.0
        %1295 = vmatmul.mubr.f32.gmra.mxu0 %v657
        %v1296 = vpop.f32.mrf.mxu0
        %v1297 = vadd.f32 0.0, %v1296
        %v1298 = vpop.f32.mrf.mxu0
        %1299 = vmatprep.mubr.f32.mxu0 0.0
        %1300 = vmatmul.mubr.f32.gmra.mxu0 %v660
        %v1301 = vpop.f32.mrf.mxu0
        %v1302 = vadd.f32 0.0, %v1301
        %v1303 = vpop.f32.mrf.mxu0
        %1304 = vmatprep.mubr.f32.mxu0 0.0
        %1305 = vmatmul.mubr.f32.gmra.mxu0 %v663
        %v1306 = vpop.f32.mrf.mxu0
        %v1307 = vadd.f32 0.0, %v1306
        %v1308 = vpop.f32.mrf.mxu0
        %1309 = vmatprep.mubr.f32.mxu0 0.0
        %1310 = vmatmul.mubr.f32.gmra.mxu0 %v666
        %v1311 = vpop.f32.mrf.mxu0
        %v1312 = vadd.f32 0.0, %v1311
        %v1313 = vpop.f32.mrf.mxu0
        %1314 = vmatprep.mubr.f32.mxu0 0.0
        %1315 = vmatmul.mubr.f32.gmra.mxu0 %v669
        %v1316 = vpop.f32.mrf.mxu0
        %v1317 = vadd.f32 0.0, %v1316
        %v1318 = vpop.f32.mrf.mxu0
        %1319 = vmatprep.mubr.f32.mxu0 0.0
        %1320 = vmatmul.mubr.f32.gmra.mxu0 %v672
        %v1321 = vpop.f32.mrf.mxu0
        %v1322 = vadd.f32 0.0, %v1321
        %v1323 = vpop.f32.mrf.mxu0
        %1324 = vmatprep.mubr.f32.mxu0 0.0
        %1325 = vmatmul.mubr.f32.gmra.mxu0 %v675
        %v1326 = vpop.f32.mrf.mxu0
        %v1327 = vadd.f32 0.0, %v1326
        %v1328 = vpop.f32.mrf.mxu0
        %1329 = vmatprep.mubr.f32.mxu0 0.0
        %1330 = vmatmul.mubr.f32.gmra.mxu0 %v678
        %v1331 = vpop.f32.mrf.mxu0
        %v1332 = vadd.f32 0.0, %v1331
        %v1333 = vpop.f32.mrf.mxu0
        %1334 = vmatprep.mubr.f32.mxu0 0.0
        %1335 = vmatmul.mubr.f32.gmra.mxu0 %v681
        %v1336 = vpop.f32.mrf.mxu0
        %v1337 = vadd.f32 0.0, %v1336
        %v1338 = vpop.f32.mrf.mxu0
        %1339 = vmatprep.mubr.f32.mxu0 0.0
        %1340 = vmatmul.mubr.f32.gmra.mxu0 %v684
        %v1341 = vpop.f32.mrf.mxu0
        %v1342 = vadd.f32 0.0, %v1341
        %v1343 = vpop.f32.mrf.mxu0
        %1344 = vmatprep.mubr.f32.mxu0 0.0
        %1345 = vmatmul.mubr.f32.gmra.mxu0 %v687
        %v1346 = vpop.f32.mrf.mxu0
        %v1347 = vadd.f32 0.0, %v1346
        %v1348 = vpop.f32.mrf.mxu0
        %1349 = vmatprep.mubr.f32.mxu0 0.0
        %1350 = vmatmul.mubr.f32.gmra.mxu0 %v690
        %v1351 = vpop.f32.mrf.mxu0
        %v1352 = vadd.f32 0.0, %v1351
        %v1353 = vpop.f32.mrf.mxu0
        %1354 = vmatprep.mubr.f32.mxu0 0.0
        %1355 = vmatmul.mubr.f32.gmra.mxu0 %v693
        %v1356 = vpop.f32.mrf.mxu0
        %v1357 = vadd.f32 0.0, %v1356
        %v1358 = vpop.f32.mrf.mxu0
        %1359 = vmatprep.mubr.f32.mxu0 0.0
        %1360 = vmatmul.mubr.f32.gmra.mxu0 %v696
        %v1361 = vpop.f32.mrf.mxu0
        %v1362 = vadd.f32 0.0, %v1361
        %v1363 = vpop.f32.mrf.mxu0
        %1364 = vmatprep.mubr.f32.mxu0 0.0
        %1365 = vmatmul.mubr.f32.gmra.mxu0 %v699
        %v1366 = vpop.f32.mrf.mxu0
        %v1367 = vadd.f32 0.0, %v1366
        %v1368 = vpop.f32.mrf.mxu0
        %1369 = vmatprep.mubr.f32.mxu0 0.0
        %1370 = vmatmul.mubr.f32.gmra.mxu0 %v702
        %v1371 = vpop.f32.mrf.mxu0
        %v1372 = vadd.f32 0.0, %v1371
        %v1373 = vpop.f32.mrf.mxu0
        %1374 = vmatprep.mubr.f32.mxu0 0.0
        %1375 = vmatmul.mubr.f32.gmra.mxu0 %v705
        %v1376 = vpop.f32.mrf.mxu0
        %v1377 = vadd.f32 0.0, %v1376
        %v1378 = vpop.f32.mrf.mxu0
        %1379 = vmatprep.mubr.f32.mxu0 0.0
        %1380 = vmatmul.mubr.f32.gmra.mxu0 %v708
        %v1381 = vpop.f32.mrf.mxu0
        %v1382 = vadd.f32 0.0, %v1381
        %v1383 = vpop.f32.mrf.mxu0
        %1384 = vmatprep.mubr.f32.mxu0 0.0
        %1385 = vmatmul.mubr.f32.gmra.mxu0 %v711
        %v1386 = vpop.f32.mrf.mxu0
        %v1387 = vadd.f32 0.0, %v1386
        %v1388 = vpop.f32.mrf.mxu0
        %1389 = vmatprep.mubr.f32.mxu0 0.0
        %1390 = vmatmul.mubr.f32.gmra.mxu0 %v714
        %v1391 = vpop.f32.mrf.mxu0
        %v1392 = vadd.f32 0.0, %v1391
        %v1393 = vpop.f32.mrf.mxu0
        %1394 = vmatprep.mubr.f32.mxu0 0.0
        %1395 = vmatmul.mubr.f32.gmra.mxu0 %v717
        %v1396 = vpop.f32.mrf.mxu0
        %v1397 = vadd.f32 0.0, %v1396
        %v1398 = vpop.f32.mrf.mxu0
        %1399 = vmatprep.mubr.f32.mxu0 0.0
        %1400 = vmatmul.mubr.f32.gmra.mxu0 %v720
        %v1401 = vpop.f32.mrf.mxu0
        %v1402 = vadd.f32 0.0, %v1401
        %v1403 = vpop.f32.mrf.mxu0
        %1404 = vmatprep.mubr.f32.mxu0 0.0
        %1405 = vmatmul.mubr.f32.gmra.mxu0 %v723
        %v1406 = vpop.f32.mrf.mxu0
        %v1407 = vadd.f32 0.0, %v1406
        %v1408 = vpop.f32.mrf.mxu0
        %1409 = vmatprep.mubr.f32.mxu0 0.0
        %1410 = vmatmul.mubr.f32.gmra.mxu0 %v726
        %v1411 = vpop.f32.mrf.mxu0
        %v1412 = vadd.f32 0.0, %v1411
        %v1413 = vpop.f32.mrf.mxu0
        %1414 = vmatprep.mubr.f32.mxu0 0.0
        %1415 = vmatmul.mubr.f32.gmra.mxu0 %v729
        %v1416 = vpop.f32.mrf.mxu0
        %v1417 = vadd.f32 0.0, %v1416
        %v1418 = vpop.f32.mrf.mxu0
        %1419 = vmatprep.mubr.f32.mxu0 0.0
        %1420 = vmatmul.mubr.f32.gmra.mxu0 %v732
        %v1421 = vpop.f32.mrf.mxu0
        %v1422 = vadd.f32 0.0, %v1421
        %v1423 = vpop.f32.mrf.mxu0
        %1424 = vmatprep.mubr.f32.mxu0 0.0
        %1425 = vmatmul.mubr.f32.gmra.mxu0 %v735
        %v1426 = vpop.f32.mrf.mxu0
        %v1427 = vadd.f32 0.0, %v1426
        %v1428 = vpop.f32.mrf.mxu0
        %1429 = vmatprep.mubr.f32.mxu0 0.0
        %1430 = vmatmul.mubr.f32.gmra.mxu0 %v738
        %v1431 = vpop.f32.mrf.mxu0
        %v1432 = vadd.f32 0.0, %v1431
        %v1433 = vpop.f32.mrf.mxu0
        %1434 = vmatprep.mubr.f32.mxu0 0.0
        %1435 = vmatmul.mubr.f32.gmra.mxu0 %v741
        %v1436 = vpop.f32.mrf.mxu0
        %v1437 = vadd.f32 0.0, %v1436
        %v1438 = vpop.f32.mrf.mxu0
        %1439 = vmatprep.mubr.f32.mxu0 0.0
        %1440 = vmatmul.mubr.f32.gmra.mxu0 %v744
        %v1441 = vpop.f32.mrf.mxu0
        %v1442 = vadd.f32 0.0, %v1441
        %v1443 = vpop.f32.mrf.mxu0
        %1444 = vmatprep.mubr.f32.mxu0 0.0
        %1445 = vmatmul.mubr.f32.gmra.mxu0 %v747
        %v1446 = vpop.f32.mrf.mxu0
        %v1447 = vadd.f32 0.0, %v1446
        %v1448 = vpop.f32.mrf.mxu0
        %1449 = vmatprep.mubr.f32.mxu0 0.0
        %1450 = vmatmul.mubr.f32.gmra.mxu0 %v750
        %v1451 = vpop.f32.mrf.mxu0
        %v1452 = vadd.f32 0.0, %v1451
        %v1453 = vpop.f32.mrf.mxu0
        %1454 = vmatprep.mubr.f32.mxu0 0.0
        %1455 = vmatmul.mubr.f32.gmra.mxu0 %v753
        %v1456 = vpop.f32.mrf.mxu0
        %v1457 = vadd.f32 0.0, %v1456
        %v1458 = vpop.f32.mrf.mxu0
        %1459 = vdwg.mxu0
        %v1460 = vld [vmem:[#allocation4] sm:$0x1]
        %v1462 = vlaneseq
        %v1463 = vshrl.u32 %v1462, 7
        %v1464 = vsub.s32 0, %v1463
        %v1465 = vrot.slane %v1460, %v1464
        %v1467 = vadd.f32 %v822, %v1465
        %v1468 = vadd.f32 %v827, %v1465
        %v1469 = vadd.f32 %v832, %v1465
        %v1470 = vadd.f32 %v837, %v1465
        %v1471 = vadd.f32 %v842, %v1465
        %v1472 = vadd.f32 %v847, %v1465
        %v1473 = vadd.f32 %v852, %v1465
        %v1474 = vadd.f32 %v857, %v1465
        %v1475 = vadd.f32 %v862, %v1465
        %v1476 = vadd.f32 %v867, %v1465
        %v1477 = vadd.f32 %v872, %v1465
        %v1478 = vadd.f32 %v877, %v1465
        %v1479 = vadd.f32 %v882, %v1465
        %v1480 = vadd.f32 %v887, %v1465
        %v1481 = vadd.f32 %v892, %v1465
        %v1482 = vadd.f32 %v897, %v1465
        %v1483 = vadd.f32 %v902, %v1465
        %v1484 = vadd.f32 %v907, %v1465
        %v1485 = vadd.f32 %v912, %v1465
        %v1486 = vadd.f32 %v917, %v1465
        %v1487 = vadd.f32 %v922, %v1465
        %v1488 = vadd.f32 %v927, %v1465
        %v1489 = vadd.f32 %v932, %v1465
        %v1490 = vadd.f32 %v937, %v1465
        %v1491 = vadd.f32 %v942, %v1465
        %v1492 = vadd.f32 %v947, %v1465
        %v1493 = vadd.f32 %v952, %v1465
        %v1494 = vadd.f32 %v957, %v1465
        %v1495 = vadd.f32 %v962, %v1465
        %v1496 = vadd.f32 %v967, %v1465
        %v1497 = vadd.f32 %v972, %v1465
        %v1498 = vadd.f32 %v977, %v1465
        %v1499 = vadd.f32 %v982, %v1465
        %v1500 = vadd.f32 %v987, %v1465
        %v1501 = vadd.f32 %v992, %v1465
        %v1502 = vadd.f32 %v997, %v1465
        %v1503 = vadd.f32 %v1002, %v1465
        %v1504 = vadd.f32 %v1007, %v1465
        %v1505 = vadd.f32 %v1012, %v1465
        %v1506 = vadd.f32 %v1017, %v1465
        %v1507 = vadd.f32 %v1022, %v1465
        %v1508 = vadd.f32 %v1027, %v1465
        %v1509 = vadd.f32 %v1032, %v1465
        %v1510 = vadd.f32 %v1037, %v1465
        %v1511 = vadd.f32 %v1042, %v1465
        %v1512 = vadd.f32 %v1047, %v1465
        %v1513 = vadd.f32 %v1052, %v1465
        %v1514 = vadd.f32 %v1057, %v1465
        %v1515 = vadd.f32 %v1062, %v1465
        %v1516 = vadd.f32 %v1067, %v1465
        %v1517 = vadd.f32 %v1072, %v1465
        %v1518 = vadd.f32 %v1077, %v1465
        %v1519 = vadd.f32 %v1082, %v1465
        %v1520 = vadd.f32 %v1087, %v1465
        %v1521 = vadd.f32 %v1092, %v1465
        %v1522 = vadd.f32 %v1097, %v1465
        %v1523 = vadd.f32 %v1102, %v1465
        %v1524 = vadd.f32 %v1107, %v1465
        %v1525 = vadd.f32 %v1112, %v1465
        %v1526 = vadd.f32 %v1117, %v1465
        %v1527 = vadd.f32 %v1122, %v1465
        %v1528 = vadd.f32 %v1127, %v1465
        %v1529 = vadd.f32 %v1132, %v1465
        %v1530 = vadd.f32 %v1137, %v1465
        %v1531 = vadd.f32 %v1142, %v1465
        %v1532 = vadd.f32 %v1147, %v1465
        %v1533 = vadd.f32 %v1152, %v1465
        %v1534 = vadd.f32 %v1157, %v1465
        %v1535 = vadd.f32 %v1162, %v1465
        %v1536 = vadd.f32 %v1167, %v1465
        %v1537 = vadd.f32 %v1172, %v1465
        %v1538 = vadd.f32 %v1177, %v1465
        %v1539 = vadd.f32 %v1182, %v1465
        %v1540 = vadd.f32 %v1187, %v1465
        %v1541 = vadd.f32 %v1192, %v1465
        %v1542 = vadd.f32 %v1197, %v1465
        %v1543 = vadd.f32 %v1202, %v1465
        %v1544 = vadd.f32 %v1207, %v1465
        %v1545 = vadd.f32 %v1212, %v1465
        %v1546 = vadd.f32 %v1217, %v1465
        %v1547 = vadd.f32 %v1222, %v1465
        %v1548 = vadd.f32 %v1227, %v1465
        %v1549 = vadd.f32 %v1232, %v1465
        %v1550 = vadd.f32 %v1237, %v1465
        %v1551 = vadd.f32 %v1242, %v1465
        %v1552 = vadd.f32 %v1247, %v1465
        %v1553 = vadd.f32 %v1252, %v1465
        %v1554 = vadd.f32 %v1257, %v1465
        %v1555 = vadd.f32 %v1262, %v1465
        %v1556 = vadd.f32 %v1267, %v1465
        %v1557 = vadd.f32 %v1272, %v1465
        %v1558 = vadd.f32 %v1277, %v1465
        %v1559 = vadd.f32 %v1282, %v1465
        %v1560 = vadd.f32 %v1287, %v1465
        %v1561 = vadd.f32 %v1292, %v1465
        %v1562 = vadd.f32 %v1297, %v1465
        %v1563 = vadd.f32 %v1302, %v1465
        %v1564 = vadd.f32 %v1307, %v1465
        %v1565 = vadd.f32 %v1312, %v1465
        %v1566 = vadd.f32 %v1317, %v1465
        %v1567 = vadd.f32 %v1322, %v1465
        %v1568 = vadd.f32 %v1327, %v1465
        %v1569 = vadd.f32 %v1332, %v1465
        %v1570 = vadd.f32 %v1337, %v1465
        %v1571 = vadd.f32 %v1342, %v1465
        %v1572 = vadd.f32 %v1347, %v1465
        %v1573 = vadd.f32 %v1352, %v1465
        %v1574 = vadd.f32 %v1357, %v1465
        %v1575 = vadd.f32 %v1362, %v1465
        %v1576 = vadd.f32 %v1367, %v1465
        %v1577 = vadd.f32 %v1372, %v1465
        %v1578 = vadd.f32 %v1377, %v1465
        %v1579 = vadd.f32 %v1382, %v1465
        %v1580 = vadd.f32 %v1387, %v1465
        %v1581 = vadd.f32 %v1392, %v1465
        %v1582 = vadd.f32 %v1397, %v1465
        %v1583 = vadd.f32 %v1402, %v1465
        %v1584 = vadd.f32 %v1407, %v1465
        %v1585 = vadd.f32 %v1412, %v1465
        %v1586 = vadd.f32 %v1417, %v1465
        %v1587 = vadd.f32 %v1422, %v1465
        %v1588 = vadd.f32 %v1427, %v1465
        %v1589 = vadd.f32 %v1432, %v1465
        %v1590 = vadd.f32 %v1437, %v1465
        %v1591 = vadd.f32 %v1442, %v1465
        %v1592 = vadd.f32 %v1447, %v1465
        %v1593 = vadd.f32 %v1452, %v1465
        %v1594 = vadd.f32 %v1457, %v1465
        %1595 = vst.msk [vmem:[%s239] sm:$0xff] %vm370, %v1467
        %1596 = vst.msk [vmem:[%s239 + $0x8] sm:$0xff] %vm370, %v1468
        %1597 = vst.msk [vmem:[%s239 + $0x10] sm:$0xff] %vm370, %v1469
        %1598 = vst.msk [vmem:[%s239 + $0x18] sm:$0xff] %vm370, %v1470
        %1599 = vst.msk [vmem:[%s239 + $0x40] sm:$0xff] %vm370, %v1471
        %1600 = vst.msk [vmem:[%s239 + $0x48] sm:$0xff] %vm370, %v1472
        %1601 = vst.msk [vmem:[%s239 + $0x50] sm:$0xff] %vm370, %v1473
        %1602 = vst.msk [vmem:[%s239 + $0x58] sm:$0xff] %vm370, %v1474
        %1603 = vst.msk [vmem:[%s239 + $0x80] sm:$0xff] %vm370, %v1475
        %1604 = vst.msk [vmem:[%s239 + $0x88] sm:$0xff] %vm370, %v1476
        %1605 = vst.msk [vmem:[%s239 + $0x90] sm:$0xff] %vm370, %v1477
        %1606 = vst.msk [vmem:[%s239 + $0x98] sm:$0xff] %vm370, %v1478
        %1607 = vst.msk [vmem:[%s239 + $0xc0] sm:$0xff] %vm370, %v1479
        %1608 = vst.msk [vmem:[%s239 + $0xc8] sm:$0xff] %vm370, %v1480
        %1609 = vst.msk [vmem:[%s239 + $0xd0] sm:$0xff] %vm370, %v1481
        %1610 = vst.msk [vmem:[%s239 + $0xd8] sm:$0xff] %vm370, %v1482
        %1611 = vst.msk [vmem:[%s239 + $0x100] sm:$0xff] %vm370, %v1483
        %1612 = vst.msk [vmem:[%s239 + $0x108] sm:$0xff] %vm370, %v1484
        %1613 = vst.msk [vmem:[%s239 + $0x110] sm:$0xff] %vm370, %v1485
        %1614 = vst.msk [vmem:[%s239 + $0x118] sm:$0xff] %vm370, %v1486
        %1615 = vst.msk [vmem:[%s239 + $0x140] sm:$0xff] %vm370, %v1487
        %1616 = vst.msk [vmem:[%s239 + $0x148] sm:$0xff] %vm370, %v1488
        %1617 = vst.msk [vmem:[%s239 + $0x150] sm:$0xff] %vm370, %v1489
        %1618 = vst.msk [vmem:[%s239 + $0x158] sm:$0xff] %vm370, %v1490
        %1619 = vst.msk [vmem:[%s239 + $0x180] sm:$0xff] %vm370, %v1491
        %1620 = vst.msk [vmem:[%s239 + $0x188] sm:$0xff] %vm370, %v1492
        %1621 = vst.msk [vmem:[%s239 + $0x190] sm:$0xff] %vm370, %v1493
        %1622 = vst.msk [vmem:[%s239 + $0x198] sm:$0xff] %vm370, %v1494
        %1623 = vst.msk [vmem:[%s239 + $0x1c0] sm:$0xff] %vm370, %v1495
        %1624 = vst.msk [vmem:[%s239 + $0x1c8] sm:$0xff] %vm370, %v1496
        %1625 = vst.msk [vmem:[%s239 + $0x1d0] sm:$0xff] %vm370, %v1497
        %1626 = vst.msk [vmem:[%s239 + $0x1d8] sm:$0xff] %vm370, %v1498
        %1627 = vst.msk [vmem:[%s239 + $0x200] sm:$0xff] %vm370, %v1499
        %1628 = vst.msk [vmem:[%s239 + $0x208] sm:$0xff] %vm370, %v1500
        %1629 = vst.msk [vmem:[%s239 + $0x210] sm:$0xff] %vm370, %v1501
        %1630 = vst.msk [vmem:[%s239 + $0x218] sm:$0xff] %vm370, %v1502
        %1631 = vst.msk [vmem:[%s239 + $0x240] sm:$0xff] %vm370, %v1503
        %1632 = vst.msk [vmem:[%s239 + $0x248] sm:$0xff] %vm370, %v1504
        %1633 = vst.msk [vmem:[%s239 + $0x250] sm:$0xff] %vm370, %v1505
        %1634 = vst.msk [vmem:[%s239 + $0x258] sm:$0xff] %vm370, %v1506
        %1635 = vst.msk [vmem:[%s239 + $0x280] sm:$0xff] %vm370, %v1507
        %1636 = vst.msk [vmem:[%s239 + $0x288] sm:$0xff] %vm370, %v1508
        %1637 = vst.msk [vmem:[%s239 + $0x290] sm:$0xff] %vm370, %v1509
        %1638 = vst.msk [vmem:[%s239 + $0x298] sm:$0xff] %vm370, %v1510
        %1639 = vst.msk [vmem:[%s239 + $0x2c0] sm:$0xff] %vm370, %v1511
        %1640 = vst.msk [vmem:[%s239 + $0x2c8] sm:$0xff] %vm370, %v1512
        %1641 = vst.msk [vmem:[%s239 + $0x2d0] sm:$0xff] %vm370, %v1513
        %1642 = vst.msk [vmem:[%s239 + $0x2d8] sm:$0xff] %vm370, %v1514
        %1643 = vst.msk [vmem:[%s239 + $0x300] sm:$0xff] %vm370, %v1515
        %1644 = vst.msk [vmem:[%s239 + $0x308] sm:$0xff] %vm370, %v1516
        %1645 = vst.msk [vmem:[%s239 + $0x310] sm:$0xff] %vm370, %v1517
        %1646 = vst.msk [vmem:[%s239 + $0x318] sm:$0xff] %vm370, %v1518
        %1647 = vst.msk [vmem:[%s239 + $0x340] sm:$0xff] %vm370, %v1519
        %1648 = vst.msk [vmem:[%s239 + $0x348] sm:$0xff] %vm370, %v1520
        %1649 = vst.msk [vmem:[%s239 + $0x350] sm:$0xff] %vm370, %v1521
        %1650 = vst.msk [vmem:[%s239 + $0x358] sm:$0xff] %vm370, %v1522
        %1651 = vst.msk [vmem:[%s239 + $0x380] sm:$0xff] %vm370, %v1523
        %1652 = vst.msk [vmem:[%s239 + $0x388] sm:$0xff] %vm370, %v1524
        %1653 = vst.msk [vmem:[%s239 + $0x390] sm:$0xff] %vm370, %v1525
        %1654 = vst.msk [vmem:[%s239 + $0x398] sm:$0xff] %vm370, %v1526
        %1655 = vst.msk [vmem:[%s239 + $0x3c0] sm:$0xff] %vm370, %v1527
        %1656 = vst.msk [vmem:[%s239 + $0x3c8] sm:$0xff] %vm370, %v1528
        %1657 = vst.msk [vmem:[%s239 + $0x3d0] sm:$0xff] %vm370, %v1529
        %1658 = vst.msk [vmem:[%s239 + $0x3d8] sm:$0xff] %vm370, %v1530
        %1659 = vst.msk [vmem:[%s239 + $0x400] sm:$0xff] %vm370, %v1531
        %1660 = vst.msk [vmem:[%s239 + $0x408] sm:$0xff] %vm370, %v1532
        %1661 = vst.msk [vmem:[%s239 + $0x410] sm:$0xff] %vm370, %v1533
        %1662 = vst.msk [vmem:[%s239 + $0x418] sm:$0xff] %vm370, %v1534
        %1663 = vst.msk [vmem:[%s239 + $0x440] sm:$0xff] %vm370, %v1535
        %1664 = vst.msk [vmem:[%s239 + $0x448] sm:$0xff] %vm370, %v1536
        %1665 = vst.msk [vmem:[%s239 + $0x450] sm:$0xff] %vm370, %v1537
        %1666 = vst.msk [vmem:[%s239 + $0x458] sm:$0xff] %vm370, %v1538
        %1667 = vst.msk [vmem:[%s239 + $0x480] sm:$0xff] %vm370, %v1539
        %1668 = vst.msk [vmem:[%s239 + $0x488] sm:$0xff] %vm370, %v1540
        %1669 = vst.msk [vmem:[%s239 + $0x490] sm:$0xff] %vm370, %v1541
        %1670 = vst.msk [vmem:[%s239 + $0x498] sm:$0xff] %vm370, %v1542
        %1671 = vst.msk [vmem:[%s239 + $0x4c0] sm:$0xff] %vm370, %v1543
        %1672 = vst.msk [vmem:[%s239 + $0x4c8] sm:$0xff] %vm370, %v1544
        %1673 = vst.msk [vmem:[%s239 + $0x4d0] sm:$0xff] %vm370, %v1545
        %1674 = vst.msk [vmem:[%s239 + $0x4d8] sm:$0xff] %vm370, %v1546
        %1675 = vst.msk [vmem:[%s239 + $0x500] sm:$0xff] %vm370, %v1547
        %1676 = vst.msk [vmem:[%s239 + $0x508] sm:$0xff] %vm370, %v1548
        %1677 = vst.msk [vmem:[%s239 + $0x510] sm:$0xff] %vm370, %v1549
        %1678 = vst.msk [vmem:[%s239 + $0x518] sm:$0xff] %vm370, %v1550
        %1679 = vst.msk [vmem:[%s239 + $0x540] sm:$0xff] %vm370, %v1551
        %1680 = vst.msk [vmem:[%s239 + $0x548] sm:$0xff] %vm370, %v1552
        %1681 = vst.msk [vmem:[%s239 + $0x550] sm:$0xff] %vm370, %v1553
        %1682 = vst.msk [vmem:[%s239 + $0x558] sm:$0xff] %vm370, %v1554
        %1683 = vst.msk [vmem:[%s239 + $0x580] sm:$0xff] %vm370, %v1555
        %1684 = vst.msk [vmem:[%s239 + $0x588] sm:$0xff] %vm370, %v1556
        %1685 = vst.msk [vmem:[%s239 + $0x590] sm:$0xff] %vm370, %v1557
        %1686 = vst.msk [vmem:[%s239 + $0x598] sm:$0xff] %vm370, %v1558
        %1687 = vst.msk [vmem:[%s239 + $0x5c0] sm:$0xff] %vm370, %v1559
        %1688 = vst.msk [vmem:[%s239 + $0x5c8] sm:$0xff] %vm370, %v1560
        %1689 = vst.msk [vmem:[%s239 + $0x5d0] sm:$0xff] %vm370, %v1561
        %1690 = vst.msk [vmem:[%s239 + $0x5d8] sm:$0xff] %vm370, %v1562
        %1691 = vst.msk [vmem:[%s239 + $0x600] sm:$0xff] %vm370, %v1563
        %1692 = vst.msk [vmem:[%s239 + $0x608] sm:$0xff] %vm370, %v1564
        %1693 = vst.msk [vmem:[%s239 + $0x610] sm:$0xff] %vm370, %v1565
        %1694 = vst.msk [vmem:[%s239 + $0x618] sm:$0xff] %vm370, %v1566
        %1695 = vst.msk [vmem:[%s239 + $0x640] sm:$0xff] %vm370, %v1567
        %1696 = vst.msk [vmem:[%s239 + $0x648] sm:$0xff] %vm370, %v1568
        %1697 = vst.msk [vmem:[%s239 + $0x650] sm:$0xff] %vm370, %v1569
        %1698 = vst.msk [vmem:[%s239 + $0x658] sm:$0xff] %vm370, %v1570
        %1699 = vst.msk [vmem:[%s239 + $0x680] sm:$0xff] %vm370, %v1571
        %1700 = vst.msk [vmem:[%s239 + $0x688] sm:$0xff] %vm370, %v1572
        %1701 = vst.msk [vmem:[%s239 + $0x690] sm:$0xff] %vm370, %v1573
        %1702 = vst.msk [vmem:[%s239 + $0x698] sm:$0xff] %vm370, %v1574
        %1703 = vst.msk [vmem:[%s239 + $0x6c0] sm:$0xff] %vm370, %v1575
        %1704 = vst.msk [vmem:[%s239 + $0x6c8] sm:$0xff] %vm370, %v1576
        %1705 = vst.msk [vmem:[%s239 + $0x6d0] sm:$0xff] %vm370, %v1577
        %1706 = vst.msk [vmem:[%s239 + $0x6d8] sm:$0xff] %vm370, %v1578
        %1707 = vst.msk [vmem:[%s239 + $0x700] sm:$0xff] %vm370, %v1579
        %1708 = vst.msk [vmem:[%s239 + $0x708] sm:$0xff] %vm370, %v1580
        %1709 = vst.msk [vmem:[%s239 + $0x710] sm:$0xff] %vm370, %v1581
        %1710 = vst.msk [vmem:[%s239 + $0x718] sm:$0xff] %vm370, %v1582
        %1711 = vst.msk [vmem:[%s239 + $0x740] sm:$0xff] %vm370, %v1583
        %1712 = vst.msk [vmem:[%s239 + $0x748] sm:$0xff] %vm370, %v1584
        %1713 = vst.msk [vmem:[%s239 + $0x750] sm:$0xff] %vm370, %v1585
        %1714 = vst.msk [vmem:[%s239 + $0x758] sm:$0xff] %vm370, %v1586
        %1715 = vst.msk [vmem:[%s239 + $0x780] sm:$0xff] %vm370, %v1587
        %1716 = vst.msk [vmem:[%s239 + $0x788] sm:$0xff] %vm370, %v1588
        %1717 = vst.msk [vmem:[%s239 + $0x790] sm:$0xff] %vm370, %v1589
        %1718 = vst.msk [vmem:[%s239 + $0x798] sm:$0xff] %vm370, %v1590
        %1719 = vst.msk [vmem:[%s239 + $0x7c0] sm:$0xff] %vm370, %v1591
        %1720 = vst.msk [vmem:[%s239 + $0x7c8] sm:$0xff] %vm370, %v1592
        %1721 = vst.msk [vmem:[%s239 + $0x7d0] sm:$0xff] %vm370, %v1593
        %1722 = vst.msk [vmem:[%s239 + $0x7d8] sm:$0xff] %vm370, %v1594
        %1723 = vrot.lane.b32.xlu0 %v1465, 8
        %v1724 = vpop.permute.xlu0 %1723
        %v1726 = vadd.f32 %v822, %v1724
        %v1727 = vadd.f32 %v827, %v1724
        %v1728 = vadd.f32 %v832, %v1724
        %v1729 = vadd.f32 %v837, %v1724
        %v1730 = vadd.f32 %v842, %v1724
        %v1731 = vadd.f32 %v847, %v1724
        %v1732 = vadd.f32 %v852, %v1724
        %v1733 = vadd.f32 %v857, %v1724
        %v1734 = vadd.f32 %v862, %v1724
        %v1735 = vadd.f32 %v867, %v1724
        %v1736 = vadd.f32 %v872, %v1724
        %v1737 = vadd.f32 %v877, %v1724
        %v1738 = vadd.f32 %v882, %v1724
        %v1739 = vadd.f32 %v887, %v1724
        %v1740 = vadd.f32 %v892, %v1724
        %v1741 = vadd.f32 %v897, %v1724
        %v1742 = vadd.f32 %v902, %v1724
        %v1743 = vadd.f32 %v907, %v1724
        %v1744 = vadd.f32 %v912, %v1724
        %v1745 = vadd.f32 %v917, %v1724
        %v1746 = vadd.f32 %v922, %v1724
        %v1747 = vadd.f32 %v927, %v1724
        %v1748 = vadd.f32 %v932, %v1724
        %v1749 = vadd.f32 %v937, %v1724
        %v1750 = vadd.f32 %v942, %v1724
        %v1751 = vadd.f32 %v947, %v1724
        %v1752 = vadd.f32 %v952, %v1724
        %v1753 = vadd.f32 %v957, %v1724
        %v1754 = vadd.f32 %v962, %v1724
        %v1755 = vadd.f32 %v967, %v1724
        %v1756 = vadd.f32 %v972, %v1724
        %v1757 = vadd.f32 %v977, %v1724
        %v1758 = vadd.f32 %v982, %v1724
        %v1759 = vadd.f32 %v987, %v1724
        %v1760 = vadd.f32 %v992, %v1724
        %v1761 = vadd.f32 %v997, %v1724
        %v1762 = vadd.f32 %v1002, %v1724
        %v1763 = vadd.f32 %v1007, %v1724
        %v1764 = vadd.f32 %v1012, %v1724
        %v1765 = vadd.f32 %v1017, %v1724
        %v1766 = vadd.f32 %v1022, %v1724
        %v1767 = vadd.f32 %v1027, %v1724
        %v1768 = vadd.f32 %v1032, %v1724
        %v1769 = vadd.f32 %v1037, %v1724
        %v1770 = vadd.f32 %v1042, %v1724
        %v1771 = vadd.f32 %v1047, %v1724
        %v1772 = vadd.f32 %v1052, %v1724
        %v1773 = vadd.f32 %v1057, %v1724
        %v1774 = vadd.f32 %v1062, %v1724
        %v1775 = vadd.f32 %v1067, %v1724
        %v1776 = vadd.f32 %v1072, %v1724
        %v1777 = vadd.f32 %v1077, %v1724
        %v1778 = vadd.f32 %v1082, %v1724
        %v1779 = vadd.f32 %v1087, %v1724
        %v1780 = vadd.f32 %v1092, %v1724
        %v1781 = vadd.f32 %v1097, %v1724
        %v1782 = vadd.f32 %v1102, %v1724
        %v1783 = vadd.f32 %v1107, %v1724
        %v1784 = vadd.f32 %v1112, %v1724
        %v1785 = vadd.f32 %v1117, %v1724
        %v1786 = vadd.f32 %v1122, %v1724
        %v1787 = vadd.f32 %v1127, %v1724
        %v1788 = vadd.f32 %v1132, %v1724
        %v1789 = vadd.f32 %v1137, %v1724
        %v1790 = vadd.f32 %v1142, %v1724
        %v1791 = vadd.f32 %v1147, %v1724
        %v1792 = vadd.f32 %v1152, %v1724
        %v1793 = vadd.f32 %v1157, %v1724
        %v1794 = vadd.f32 %v1162, %v1724
        %v1795 = vadd.f32 %v1167, %v1724
        %v1796 = vadd.f32 %v1172, %v1724
        %v1797 = vadd.f32 %v1177, %v1724
        %v1798 = vadd.f32 %v1182, %v1724
        %v1799 = vadd.f32 %v1187, %v1724
        %v1800 = vadd.f32 %v1192, %v1724
        %v1801 = vadd.f32 %v1197, %v1724
        %v1802 = vadd.f32 %v1202, %v1724
        %v1803 = vadd.f32 %v1207, %v1724
        %v1804 = vadd.f32 %v1212, %v1724
        %v1805 = vadd.f32 %v1217, %v1724
        %v1806 = vadd.f32 %v1222, %v1724
        %v1807 = vadd.f32 %v1227, %v1724
        %v1808 = vadd.f32 %v1232, %v1724
        %v1809 = vadd.f32 %v1237, %v1724
        %v1810 = vadd.f32 %v1242, %v1724
        %v1811 = vadd.f32 %v1247, %v1724
        %v1812 = vadd.f32 %v1252, %v1724
        %v1813 = vadd.f32 %v1257, %v1724
        %v1814 = vadd.f32 %v1262, %v1724
        %v1815 = vadd.f32 %v1267, %v1724
        %v1816 = vadd.f32 %v1272, %v1724
        %v1817 = vadd.f32 %v1277, %v1724
        %v1818 = vadd.f32 %v1282, %v1724
        %v1819 = vadd.f32 %v1287, %v1724
        %v1820 = vadd.f32 %v1292, %v1724
        %v1821 = vadd.f32 %v1297, %v1724
        %v1822 = vadd.f32 %v1302, %v1724
        %v1823 = vadd.f32 %v1307, %v1724
        %v1824 = vadd.f32 %v1312, %v1724
        %v1825 = vadd.f32 %v1317, %v1724
        %v1826 = vadd.f32 %v1322, %v1724
        %v1827 = vadd.f32 %v1327, %v1724
        %v1828 = vadd.f32 %v1332, %v1724
        %v1829 = vadd.f32 %v1337, %v1724
        %v1830 = vadd.f32 %v1342, %v1724
        %v1831 = vadd.f32 %v1347, %v1724
        %v1832 = vadd.f32 %v1352, %v1724
        %v1833 = vadd.f32 %v1357, %v1724
        %v1834 = vadd.f32 %v1362, %v1724
        %v1835 = vadd.f32 %v1367, %v1724
        %v1836 = vadd.f32 %v1372, %v1724
        %v1837 = vadd.f32 %v1377, %v1724
        %v1838 = vadd.f32 %v1382, %v1724
        %v1839 = vadd.f32 %v1387, %v1724
        %v1840 = vadd.f32 %v1392, %v1724
        %v1841 = vadd.f32 %v1397, %v1724
        %v1842 = vadd.f32 %v1402, %v1724
        %v1843 = vadd.f32 %v1407, %v1724
        %v1844 = vadd.f32 %v1412, %v1724
        %v1845 = vadd.f32 %v1417, %v1724
        %v1846 = vadd.f32 %v1422, %v1724
        %v1847 = vadd.f32 %v1427, %v1724
        %v1848 = vadd.f32 %v1432, %v1724
        %v1849 = vadd.f32 %v1437, %v1724
        %v1850 = vadd.f32 %v1442, %v1724
        %v1851 = vadd.f32 %v1447, %v1724
        %v1852 = vadd.f32 %v1452, %v1724
        %v1853 = vadd.f32 %v1457, %v1724
        %1982 = vrot.lane.b32.xlu0 %v1726, 120
        %v1983 = vpop.permute.xlu0 %1982
        %1984 = vrot.lane.b32.xlu0 %v1727, 120
        %v1985 = vpop.permute.xlu0 %1984
        %1986 = vrot.lane.b32.xlu0 %v1728, 120
        %v1987 = vpop.permute.xlu0 %1986
        %1988 = vrot.lane.b32.xlu0 %v1729, 120
        %v1989 = vpop.permute.xlu0 %1988
        %1990 = vrot.lane.b32.xlu0 %v1730, 120
        %v1991 = vpop.permute.xlu0 %1990
        %1992 = vrot.lane.b32.xlu0 %v1731, 120
        %v1993 = vpop.permute.xlu0 %1992
        %1994 = vrot.lane.b32.xlu0 %v1732, 120
        %v1995 = vpop.permute.xlu0 %1994
        %1996 = vrot.lane.b32.xlu0 %v1733, 120
        %v1997 = vpop.permute.xlu0 %1996
        %1998 = vrot.lane.b32.xlu0 %v1734, 120
        %v1999 = vpop.permute.xlu0 %1998
        %2000 = vrot.lane.b32.xlu0 %v1735, 120
        %v2001 = vpop.permute.xlu0 %2000
        %2002 = vrot.lane.b32.xlu0 %v1736, 120
        %v2003 = vpop.permute.xlu0 %2002
        %2004 = vrot.lane.b32.xlu0 %v1737, 120
        %v2005 = vpop.permute.xlu0 %2004
        %2006 = vrot.lane.b32.xlu0 %v1738, 120
        %v2007 = vpop.permute.xlu0 %2006
        %2008 = vrot.lane.b32.xlu0 %v1739, 120
        %v2009 = vpop.permute.xlu0 %2008
        %2010 = vrot.lane.b32.xlu0 %v1740, 120
        %v2011 = vpop.permute.xlu0 %2010
        %2012 = vrot.lane.b32.xlu0 %v1741, 120
        %v2013 = vpop.permute.xlu0 %2012
        %2014 = vrot.lane.b32.xlu0 %v1742, 120
        %v2015 = vpop.permute.xlu0 %2014
        %2016 = vrot.lane.b32.xlu0 %v1743, 120
        %v2017 = vpop.permute.xlu0 %2016
        %2018 = vrot.lane.b32.xlu0 %v1744, 120
        %v2019 = vpop.permute.xlu0 %2018
        %2020 = vrot.lane.b32.xlu0 %v1745, 120
        %v2021 = vpop.permute.xlu0 %2020
        %2022 = vrot.lane.b32.xlu0 %v1746, 120
        %v2023 = vpop.permute.xlu0 %2022
        %2024 = vrot.lane.b32.xlu0 %v1747, 120
        %v2025 = vpop.permute.xlu0 %2024
        %2026 = vrot.lane.b32.xlu0 %v1748, 120
        %v2027 = vpop.permute.xlu0 %2026
        %2028 = vrot.lane.b32.xlu0 %v1749, 120
        %v2029 = vpop.permute.xlu0 %2028
        %2030 = vrot.lane.b32.xlu0 %v1750, 120
        %v2031 = vpop.permute.xlu0 %2030
        %2032 = vrot.lane.b32.xlu0 %v1751, 120
        %v2033 = vpop.permute.xlu0 %2032
        %2034 = vrot.lane.b32.xlu0 %v1752, 120
        %v2035 = vpop.permute.xlu0 %2034
        %2036 = vrot.lane.b32.xlu0 %v1753, 120
        %v2037 = vpop.permute.xlu0 %2036
        %2038 = vrot.lane.b32.xlu0 %v1754, 120
        %v2039 = vpop.permute.xlu0 %2038
        %2040 = vrot.lane.b32.xlu0 %v1755, 120
        %v2041 = vpop.permute.xlu0 %2040
        %2042 = vrot.lane.b32.xlu0 %v1756, 120
        %v2043 = vpop.permute.xlu0 %2042
        %2044 = vrot.lane.b32.xlu0 %v1757, 120
        %v2045 = vpop.permute.xlu0 %2044
        %2046 = vrot.lane.b32.xlu0 %v1758, 120
        %v2047 = vpop.permute.xlu0 %2046
        %2048 = vrot.lane.b32.xlu0 %v1759, 120
        %v2049 = vpop.permute.xlu0 %2048
        %2050 = vrot.lane.b32.xlu0 %v1760, 120
        %v2051 = vpop.permute.xlu0 %2050
        %2052 = vrot.lane.b32.xlu0 %v1761, 120
        %v2053 = vpop.permute.xlu0 %2052
        %2054 = vrot.lane.b32.xlu0 %v1762, 120
        %v2055 = vpop.permute.xlu0 %2054
        %2056 = vrot.lane.b32.xlu0 %v1763, 120
        %v2057 = vpop.permute.xlu0 %2056
        %2058 = vrot.lane.b32.xlu0 %v1764, 120
        %v2059 = vpop.permute.xlu0 %2058
        %2060 = vrot.lane.b32.xlu0 %v1765, 120
        %v2061 = vpop.permute.xlu0 %2060
        %2062 = vrot.lane.b32.xlu0 %v1766, 120
        %v2063 = vpop.permute.xlu0 %2062
        %2064 = vrot.lane.b32.xlu0 %v1767, 120
        %v2065 = vpop.permute.xlu0 %2064
        %2066 = vrot.lane.b32.xlu0 %v1768, 120
        %v2067 = vpop.permute.xlu0 %2066
        %2068 = vrot.lane.b32.xlu0 %v1769, 120
        %v2069 = vpop.permute.xlu0 %2068
        %2070 = vrot.lane.b32.xlu0 %v1770, 120
        %v2071 = vpop.permute.xlu0 %2070
        %2072 = vrot.lane.b32.xlu0 %v1771, 120
        %v2073 = vpop.permute.xlu0 %2072
        %2074 = vrot.lane.b32.xlu0 %v1772, 120
        %v2075 = vpop.permute.xlu0 %2074
        %2076 = vrot.lane.b32.xlu0 %v1773, 120
        %v2077 = vpop.permute.xlu0 %2076
        %2078 = vrot.lane.b32.xlu0 %v1774, 120
        %v2079 = vpop.permute.xlu0 %2078
        %2080 = vrot.lane.b32.xlu0 %v1775, 120
        %v2081 = vpop.permute.xlu0 %2080
        %2082 = vrot.lane.b32.xlu0 %v1776, 120
        %v2083 = vpop.permute.xlu0 %2082
        %2084 = vrot.lane.b32.xlu0 %v1777, 120
        %v2085 = vpop.permute.xlu0 %2084
        %2086 = vrot.lane.b32.xlu0 %v1778, 120
        %v2087 = vpop.permute.xlu0 %2086
        %2088 = vrot.lane.b32.xlu0 %v1779, 120
        %v2089 = vpop.permute.xlu0 %2088
        %2090 = vrot.lane.b32.xlu0 %v1780, 120
        %v2091 = vpop.permute.xlu0 %2090
        %2092 = vrot.lane.b32.xlu0 %v1781, 120
        %v2093 = vpop.permute.xlu0 %2092
        %2094 = vrot.lane.b32.xlu0 %v1782, 120
        %v2095 = vpop.permute.xlu0 %2094
        %2096 = vrot.lane.b32.xlu0 %v1783, 120
        %v2097 = vpop.permute.xlu0 %2096
        %2098 = vrot.lane.b32.xlu0 %v1784, 120
        %v2099 = vpop.permute.xlu0 %2098
        %2100 = vrot.lane.b32.xlu0 %v1785, 120
        %v2101 = vpop.permute.xlu0 %2100
        %2102 = vrot.lane.b32.xlu0 %v1786, 120
        %v2103 = vpop.permute.xlu0 %2102
        %2104 = vrot.lane.b32.xlu0 %v1787, 120
        %v2105 = vpop.permute.xlu0 %2104
        %2106 = vrot.lane.b32.xlu0 %v1788, 120
        %v2107 = vpop.permute.xlu0 %2106
        %2108 = vrot.lane.b32.xlu0 %v1789, 120
        %v2109 = vpop.permute.xlu0 %2108
        %2110 = vrot.lane.b32.xlu0 %v1790, 120
        %v2111 = vpop.permute.xlu0 %2110
        %2112 = vrot.lane.b32.xlu0 %v1791, 120
        %v2113 = vpop.permute.xlu0 %2112
        %2114 = vrot.lane.b32.xlu0 %v1792, 120
        %v2115 = vpop.permute.xlu0 %2114
        %2116 = vrot.lane.b32.xlu0 %v1793, 120
        %v2117 = vpop.permute.xlu0 %2116
        %2118 = vrot.lane.b32.xlu0 %v1794, 120
        %v2119 = vpop.permute.xlu0 %2118
        %2120 = vrot.lane.b32.xlu0 %v1795, 120
        %v2121 = vpop.permute.xlu0 %2120
        %2122 = vrot.lane.b32.xlu0 %v1796, 120
        %v2123 = vpop.permute.xlu0 %2122
        %2124 = vrot.lane.b32.xlu0 %v1797, 120
        %v2125 = vpop.permute.xlu0 %2124
        %2126 = vrot.lane.b32.xlu0 %v1798, 120
        %v2127 = vpop.permute.xlu0 %2126
        %2128 = vrot.lane.b32.xlu0 %v1799, 120
        %v2129 = vpop.permute.xlu0 %2128
        %2130 = vrot.lane.b32.xlu0 %v1800, 120
        %v2131 = vpop.permute.xlu0 %2130
        %2132 = vrot.lane.b32.xlu0 %v1801, 120
        %v2133 = vpop.permute.xlu0 %2132
        %2134 = vrot.lane.b32.xlu0 %v1802, 120
        %v2135 = vpop.permute.xlu0 %2134
        %2136 = vrot.lane.b32.xlu0 %v1803, 120
        %v2137 = vpop.permute.xlu0 %2136
        %2138 = vrot.lane.b32.xlu0 %v1804, 120
        %v2139 = vpop.permute.xlu0 %2138
        %2140 = vrot.lane.b32.xlu0 %v1805, 120
        %v2141 = vpop.permute.xlu0 %2140
        %2142 = vrot.lane.b32.xlu0 %v1806, 120
        %v2143 = vpop.permute.xlu0 %2142
        %2144 = vrot.lane.b32.xlu0 %v1807, 120
        %v2145 = vpop.permute.xlu0 %2144
        %2146 = vrot.lane.b32.xlu0 %v1808, 120
        %v2147 = vpop.permute.xlu0 %2146
        %2148 = vrot.lane.b32.xlu0 %v1809, 120
        %v2149 = vpop.permute.xlu0 %2148
        %2150 = vrot.lane.b32.xlu0 %v1810, 120
        %v2151 = vpop.permute.xlu0 %2150
        %2152 = vrot.lane.b32.xlu0 %v1811, 120
        %v2153 = vpop.permute.xlu0 %2152
        %2154 = vrot.lane.b32.xlu0 %v1812, 120
        %v2155 = vpop.permute.xlu0 %2154
        %2156 = vrot.lane.b32.xlu0 %v1813, 120
        %v2157 = vpop.permute.xlu0 %2156
        %2158 = vrot.lane.b32.xlu0 %v1814, 120
        %v2159 = vpop.permute.xlu0 %2158
        %2160 = vrot.lane.b32.xlu0 %v1815, 120
        %v2161 = vpop.permute.xlu0 %2160
        %2162 = vrot.lane.b32.xlu0 %v1816, 120
        %v2163 = vpop.permute.xlu0 %2162
        %2164 = vrot.lane.b32.xlu0 %v1817, 120
        %v2165 = vpop.permute.xlu0 %2164
        %2166 = vrot.lane.b32.xlu0 %v1818, 120
        %v2167 = vpop.permute.xlu0 %2166
        %2168 = vrot.lane.b32.xlu0 %v1819, 120
        %v2169 = vpop.permute.xlu0 %2168
        %2170 = vrot.lane.b32.xlu0 %v1820, 120
        %v2171 = vpop.permute.xlu0 %2170
        %2172 = vrot.lane.b32.xlu0 %v1821, 120
        %v2173 = vpop.permute.xlu0 %2172
        %2174 = vrot.lane.b32.xlu0 %v1822, 120
        %v2175 = vpop.permute.xlu0 %2174
        %2176 = vrot.lane.b32.xlu0 %v1823, 120
        %v2177 = vpop.permute.xlu0 %2176
        %2178 = vrot.lane.b32.xlu0 %v1824, 120
        %v2179 = vpop.permute.xlu0 %2178
        %2180 = vrot.lane.b32.xlu0 %v1825, 120
        %v2181 = vpop.permute.xlu0 %2180
        %2182 = vrot.lane.b32.xlu0 %v1826, 120
        %v2183 = vpop.permute.xlu0 %2182
        %2184 = vrot.lane.b32.xlu0 %v1827, 120
        %v2185 = vpop.permute.xlu0 %2184
        %2186 = vrot.lane.b32.xlu0 %v1828, 120
        %v2187 = vpop.permute.xlu0 %2186
        %2188 = vrot.lane.b32.xlu0 %v1829, 120
        %v2189 = vpop.permute.xlu0 %2188
        %2190 = vrot.lane.b32.xlu0 %v1830, 120
        %v2191 = vpop.permute.xlu0 %2190
        %2192 = vrot.lane.b32.xlu0 %v1831, 120
        %v2193 = vpop.permute.xlu0 %2192
        %2194 = vrot.lane.b32.xlu0 %v1832, 120
        %v2195 = vpop.permute.xlu0 %2194
        %2196 = vrot.lane.b32.xlu0 %v1833, 120
        %v2197 = vpop.permute.xlu0 %2196
        %2198 = vrot.lane.b32.xlu0 %v1834, 120
        %v2199 = vpop.permute.xlu0 %2198
        %2200 = vrot.lane.b32.xlu0 %v1835, 120
        %v2201 = vpop.permute.xlu0 %2200
        %2202 = vrot.lane.b32.xlu0 %v1836, 120
        %v2203 = vpop.permute.xlu0 %2202
        %2204 = vrot.lane.b32.xlu0 %v1837, 120
        %v2205 = vpop.permute.xlu0 %2204
        %2206 = vrot.lane.b32.xlu0 %v1838, 120
        %v2207 = vpop.permute.xlu0 %2206
        %2208 = vrot.lane.b32.xlu0 %v1839, 120
        %v2209 = vpop.permute.xlu0 %2208
        %2210 = vrot.lane.b32.xlu0 %v1840, 120
        %v2211 = vpop.permute.xlu0 %2210
        %2212 = vrot.lane.b32.xlu0 %v1841, 120
        %v2213 = vpop.permute.xlu0 %2212
        %2214 = vrot.lane.b32.xlu0 %v1842, 120
        %v2215 = vpop.permute.xlu0 %2214
        %2216 = vrot.lane.b32.xlu0 %v1843, 120
        %v2217 = vpop.permute.xlu0 %2216
        %2218 = vrot.lane.b32.xlu0 %v1844, 120
        %v2219 = vpop.permute.xlu0 %2218
        %2220 = vrot.lane.b32.xlu0 %v1845, 120
        %v2221 = vpop.permute.xlu0 %2220
        %2222 = vrot.lane.b32.xlu0 %v1846, 120
        %v2223 = vpop.permute.xlu0 %2222
        %2224 = vrot.lane.b32.xlu0 %v1847, 120
        %v2225 = vpop.permute.xlu0 %2224
        %2226 = vrot.lane.b32.xlu0 %v1848, 120
        %v2227 = vpop.permute.xlu0 %2226
        %2228 = vrot.lane.b32.xlu0 %v1849, 120
        %v2229 = vpop.permute.xlu0 %2228
        %2230 = vrot.lane.b32.xlu0 %v1850, 120
        %v2231 = vpop.permute.xlu0 %2230
        %2232 = vrot.lane.b32.xlu0 %v1851, 120
        %v2233 = vpop.permute.xlu0 %2232
        %2234 = vrot.lane.b32.xlu0 %v1852, 120
        %v2235 = vpop.permute.xlu0 %2234
        %2236 = vrot.lane.b32.xlu0 %v1853, 120
        %v2237 = vpop.permute.xlu0 %2236
        %s2366 = scalar_lea.vmem %s239, 32
        %2367 = vst.msk [vmem:[%s2366] sm:$0xff] %vm370, %v1983
        %2368 = vst.msk [vmem:[%s2366 + $0x8] sm:$0xff] %vm370, %v1985
        %2369 = vst.msk [vmem:[%s2366 + $0x10] sm:$0xff] %vm370, %v1987
        %2370 = vst.msk [vmem:[%s2366 + $0x18] sm:$0xff] %vm370, %v1989
        %2371 = vst.msk [vmem:[%s2366 + $0x40] sm:$0xff] %vm370, %v1991
        %2372 = vst.msk [vmem:[%s2366 + $0x48] sm:$0xff] %vm370, %v1993
        %2373 = vst.msk [vmem:[%s2366 + $0x50] sm:$0xff] %vm370, %v1995
        %2374 = vst.msk [vmem:[%s2366 + $0x58] sm:$0xff] %vm370, %v1997
        %2375 = vst.msk [vmem:[%s2366 + $0x80] sm:$0xff] %vm370, %v1999
        %2376 = vst.msk [vmem:[%s2366 + $0x88] sm:$0xff] %vm370, %v2001
        %2377 = vst.msk [vmem:[%s2366 + $0x90] sm:$0xff] %vm370, %v2003
        %2378 = vst.msk [vmem:[%s2366 + $0x98] sm:$0xff] %vm370, %v2005
        %2379 = vst.msk [vmem:[%s2366 + $0xc0] sm:$0xff] %vm370, %v2007
        %2380 = vst.msk [vmem:[%s2366 + $0xc8] sm:$0xff] %vm370, %v2009
        %2381 = vst.msk [vmem:[%s2366 + $0xd0] sm:$0xff] %vm370, %v2011
        %2382 = vst.msk [vmem:[%s2366 + $0xd8] sm:$0xff] %vm370, %v2013
        %2383 = vst.msk [vmem:[%s2366 + $0x100] sm:$0xff] %vm370, %v2015
        %2384 = vst.msk [vmem:[%s2366 + $0x108] sm:$0xff] %vm370, %v2017
        %2385 = vst.msk [vmem:[%s2366 + $0x110] sm:$0xff] %vm370, %v2019
        %2386 = vst.msk [vmem:[%s2366 + $0x118] sm:$0xff] %vm370, %v2021
        %2387 = vst.msk [vmem:[%s2366 + $0x140] sm:$0xff] %vm370, %v2023
        %2388 = vst.msk [vmem:[%s2366 + $0x148] sm:$0xff] %vm370, %v2025
        %2389 = vst.msk [vmem:[%s2366 + $0x150] sm:$0xff] %vm370, %v2027
        %2390 = vst.msk [vmem:[%s2366 + $0x158] sm:$0xff] %vm370, %v2029
        %2391 = vst.msk [vmem:[%s2366 + $0x180] sm:$0xff] %vm370, %v2031
        %2392 = vst.msk [vmem:[%s2366 + $0x188] sm:$0xff] %vm370, %v2033
        %2393 = vst.msk [vmem:[%s2366 + $0x190] sm:$0xff] %vm370, %v2035
        %2394 = vst.msk [vmem:[%s2366 + $0x198] sm:$0xff] %vm370, %v2037
        %2395 = vst.msk [vmem:[%s2366 + $0x1c0] sm:$0xff] %vm370, %v2039
        %2396 = vst.msk [vmem:[%s2366 + $0x1c8] sm:$0xff] %vm370, %v2041
        %2397 = vst.msk [vmem:[%s2366 + $0x1d0] sm:$0xff] %vm370, %v2043
        %2398 = vst.msk [vmem:[%s2366 + $0x1d8] sm:$0xff] %vm370, %v2045
        %2399 = vst.msk [vmem:[%s2366 + $0x200] sm:$0xff] %vm370, %v2047
        %2400 = vst.msk [vmem:[%s2366 + $0x208] sm:$0xff] %vm370, %v2049
        %2401 = vst.msk [vmem:[%s2366 + $0x210] sm:$0xff] %vm370, %v2051
        %2402 = vst.msk [vmem:[%s2366 + $0x218] sm:$0xff] %vm370, %v2053
        %2403 = vst.msk [vmem:[%s2366 + $0x240] sm:$0xff] %vm370, %v2055
        %2404 = vst.msk [vmem:[%s2366 + $0x248] sm:$0xff] %vm370, %v2057
        %2405 = vst.msk [vmem:[%s2366 + $0x250] sm:$0xff] %vm370, %v2059
        %2406 = vst.msk [vmem:[%s2366 + $0x258] sm:$0xff] %vm370, %v2061
        %2407 = vst.msk [vmem:[%s2366 + $0x280] sm:$0xff] %vm370, %v2063
        %2408 = vst.msk [vmem:[%s2366 + $0x288] sm:$0xff] %vm370, %v2065
        %2409 = vst.msk [vmem:[%s2366 + $0x290] sm:$0xff] %vm370, %v2067
        %2410 = vst.msk [vmem:[%s2366 + $0x298] sm:$0xff] %vm370, %v2069
        %2411 = vst.msk [vmem:[%s2366 + $0x2c0] sm:$0xff] %vm370, %v2071
        %2412 = vst.msk [vmem:[%s2366 + $0x2c8] sm:$0xff] %vm370, %v2073
        %2413 = vst.msk [vmem:[%s2366 + $0x2d0] sm:$0xff] %vm370, %v2075
        %2414 = vst.msk [vmem:[%s2366 + $0x2d8] sm:$0xff] %vm370, %v2077
        %2415 = vst.msk [vmem:[%s2366 + $0x300] sm:$0xff] %vm370, %v2079
        %2416 = vst.msk [vmem:[%s2366 + $0x308] sm:$0xff] %vm370, %v2081
        %2417 = vst.msk [vmem:[%s2366 + $0x310] sm:$0xff] %vm370, %v2083
        %2418 = vst.msk [vmem:[%s2366 + $0x318] sm:$0xff] %vm370, %v2085
        %2419 = vst.msk [vmem:[%s2366 + $0x340] sm:$0xff] %vm370, %v2087
        %2420 = vst.msk [vmem:[%s2366 + $0x348] sm:$0xff] %vm370, %v2089
        %2421 = vst.msk [vmem:[%s2366 + $0x350] sm:$0xff] %vm370, %v2091
        %2422 = vst.msk [vmem:[%s2366 + $0x358] sm:$0xff] %vm370, %v2093
        %2423 = vst.msk [vmem:[%s2366 + $0x380] sm:$0xff] %vm370, %v2095
        %2424 = vst.msk [vmem:[%s2366 + $0x388] sm:$0xff] %vm370, %v2097
        %2425 = vst.msk [vmem:[%s2366 + $0x390] sm:$0xff] %vm370, %v2099
        %2426 = vst.msk [vmem:[%s2366 + $0x398] sm:$0xff] %vm370, %v2101
        %2427 = vst.msk [vmem:[%s2366 + $0x3c0] sm:$0xff] %vm370, %v2103
        %2428 = vst.msk [vmem:[%s2366 + $0x3c8] sm:$0xff] %vm370, %v2105
        %2429 = vst.msk [vmem:[%s2366 + $0x3d0] sm:$0xff] %vm370, %v2107
        %2430 = vst.msk [vmem:[%s2366 + $0x3d8] sm:$0xff] %vm370, %v2109
        %2431 = vst.msk [vmem:[%s2366 + $0x400] sm:$0xff] %vm370, %v2111
        %2432 = vst.msk [vmem:[%s2366 + $0x408] sm:$0xff] %vm370, %v2113
        %2433 = vst.msk [vmem:[%s2366 + $0x410] sm:$0xff] %vm370, %v2115
        %2434 = vst.msk [vmem:[%s2366 + $0x418] sm:$0xff] %vm370, %v2117
        %2435 = vst.msk [vmem:[%s2366 + $0x440] sm:$0xff] %vm370, %v2119
        %2436 = vst.msk [vmem:[%s2366 + $0x448] sm:$0xff] %vm370, %v2121
        %2437 = vst.msk [vmem:[%s2366 + $0x450] sm:$0xff] %vm370, %v2123
        %2438 = vst.msk [vmem:[%s2366 + $0x458] sm:$0xff] %vm370, %v2125
        %2439 = vst.msk [vmem:[%s2366 + $0x480] sm:$0xff] %vm370, %v2127
        %2440 = vst.msk [vmem:[%s2366 + $0x488] sm:$0xff] %vm370, %v2129
        %2441 = vst.msk [vmem:[%s2366 + $0x490] sm:$0xff] %vm370, %v2131
        %2442 = vst.msk [vmem:[%s2366 + $0x498] sm:$0xff] %vm370, %v2133
        %2443 = vst.msk [vmem:[%s2366 + $0x4c0] sm:$0xff] %vm370, %v2135
        %2444 = vst.msk [vmem:[%s2366 + $0x4c8] sm:$0xff] %vm370, %v2137
        %2445 = vst.msk [vmem:[%s2366 + $0x4d0] sm:$0xff] %vm370, %v2139
        %2446 = vst.msk [vmem:[%s2366 + $0x4d8] sm:$0xff] %vm370, %v2141
        %2447 = vst.msk [vmem:[%s2366 + $0x500] sm:$0xff] %vm370, %v2143
        %2448 = vst.msk [vmem:[%s2366 + $0x508] sm:$0xff] %vm370, %v2145
        %2449 = vst.msk [vmem:[%s2366 + $0x510] sm:$0xff] %vm370, %v2147
        %2450 = vst.msk [vmem:[%s2366 + $0x518] sm:$0xff] %vm370, %v2149
        %2451 = vst.msk [vmem:[%s2366 + $0x540] sm:$0xff] %vm370, %v2151
        %2452 = vst.msk [vmem:[%s2366 + $0x548] sm:$0xff] %vm370, %v2153
        %2453 = vst.msk [vmem:[%s2366 + $0x550] sm:$0xff] %vm370, %v2155
        %2454 = vst.msk [vmem:[%s2366 + $0x558] sm:$0xff] %vm370, %v2157
        %2455 = vst.msk [vmem:[%s2366 + $0x580] sm:$0xff] %vm370, %v2159
        %2456 = vst.msk [vmem:[%s2366 + $0x588] sm:$0xff] %vm370, %v2161
        %2457 = vst.msk [vmem:[%s2366 + $0x590] sm:$0xff] %vm370, %v2163
        %2458 = vst.msk [vmem:[%s2366 + $0x598] sm:$0xff] %vm370, %v2165
        %2459 = vst.msk [vmem:[%s2366 + $0x5c0] sm:$0xff] %vm370, %v2167
        %2460 = vst.msk [vmem:[%s2366 + $0x5c8] sm:$0xff] %vm370, %v2169
        %2461 = vst.msk [vmem:[%s2366 + $0x5d0] sm:$0xff] %vm370, %v2171
        %2462 = vst.msk [vmem:[%s2366 + $0x5d8] sm:$0xff] %vm370, %v2173
        %2463 = vst.msk [vmem:[%s2366 + $0x600] sm:$0xff] %vm370, %v2175
        %2464 = vst.msk [vmem:[%s2366 + $0x608] sm:$0xff] %vm370, %v2177
        %2465 = vst.msk [vmem:[%s2366 + $0x610] sm:$0xff] %vm370, %v2179
        %2466 = vst.msk [vmem:[%s2366 + $0x618] sm:$0xff] %vm370, %v2181
        %2467 = vst.msk [vmem:[%s2366 + $0x640] sm:$0xff] %vm370, %v2183
        %2468 = vst.msk [vmem:[%s2366 + $0x648] sm:$0xff] %vm370, %v2185
        %2469 = vst.msk [vmem:[%s2366 + $0x650] sm:$0xff] %vm370, %v2187
        %2470 = vst.msk [vmem:[%s2366 + $0x658] sm:$0xff] %vm370, %v2189
        %2471 = vst.msk [vmem:[%s2366 + $0x680] sm:$0xff] %vm370, %v2191
        %2472 = vst.msk [vmem:[%s2366 + $0x688] sm:$0xff] %vm370, %v2193
        %2473 = vst.msk [vmem:[%s2366 + $0x690] sm:$0xff] %vm370, %v2195
        %2474 = vst.msk [vmem:[%s2366 + $0x698] sm:$0xff] %vm370, %v2197
        %2475 = vst.msk [vmem:[%s2366 + $0x6c0] sm:$0xff] %vm370, %v2199
        %2476 = vst.msk [vmem:[%s2366 + $0x6c8] sm:$0xff] %vm370, %v2201
        %2477 = vst.msk [vmem:[%s2366 + $0x6d0] sm:$0xff] %vm370, %v2203
        %2478 = vst.msk [vmem:[%s2366 + $0x6d8] sm:$0xff] %vm370, %v2205
        %2479 = vst.msk [vmem:[%s2366 + $0x700] sm:$0xff] %vm370, %v2207
        %2480 = vst.msk [vmem:[%s2366 + $0x708] sm:$0xff] %vm370, %v2209
        %2481 = vst.msk [vmem:[%s2366 + $0x710] sm:$0xff] %vm370, %v2211
        %2482 = vst.msk [vmem:[%s2366 + $0x718] sm:$0xff] %vm370, %v2213
        %2483 = vst.msk [vmem:[%s2366 + $0x740] sm:$0xff] %vm370, %v2215
        %2484 = vst.msk [vmem:[%s2366 + $0x748] sm:$0xff] %vm370, %v2217
        %2485 = vst.msk [vmem:[%s2366 + $0x750] sm:$0xff] %vm370, %v2219
        %2486 = vst.msk [vmem:[%s2366 + $0x758] sm:$0xff] %vm370, %v2221
        %2487 = vst.msk [vmem:[%s2366 + $0x780] sm:$0xff] %vm370, %v2223
        %2488 = vst.msk [vmem:[%s2366 + $0x788] sm:$0xff] %vm370, %v2225
        %2489 = vst.msk [vmem:[%s2366 + $0x790] sm:$0xff] %vm370, %v2227
        %2490 = vst.msk [vmem:[%s2366 + $0x798] sm:$0xff] %vm370, %v2229
        %2491 = vst.msk [vmem:[%s2366 + $0x7c0] sm:$0xff] %vm370, %v2231
        %2492 = vst.msk [vmem:[%s2366 + $0x7c8] sm:$0xff] %vm370, %v2233
        %2493 = vst.msk [vmem:[%s2366 + $0x7d0] sm:$0xff] %vm370, %v2235
        %2494 = vst.msk [vmem:[%s2366 + $0x7d8] sm:$0xff] %vm370, %v2237
        %s2495 = smul.u32 32, %s21
        %p2496 = scmp.lt.s32.totalorder %s20, 1
        %s2497 = scalar_select %p2496, %s20, 1
        %p2498 = scmp.lt.s32.totalorder %s2495, 31
        %s2499 = scalar_select %p2498, %s2495, 31
        %s2500 = smul.addr %s2499, 8
        %s2501 = smul.addr %s2497, 256
        %s2502 = sadd.s32 %s2500, %s2501
        %s2503 = smul.addr %s2502, 8
        %s2504 = scalar_lea.vmem %s3, %s2503
        // Predicated region
        $region41: #{tpu_custom_call.1} parent=31 // pred_check
          %p2505 = pneg %p118
        $region42: #{tpu_custom_call.1} parent=31 // pred_check_branch
          %2507 = sbr.rel (%p2505) target = $region44
        $region43: #{tpu_custom_call.1} parent=31 // pred_region
          %s2508 = smul.u32 32, %s21
        $region44: #{tpu_custom_call.1} parent=31 // pred_fallthru
          _
      $region32: #{tpu_custom_call.1} parent=5 // pred_fallthru
        _
      %p2509 = scmp.le.s32.totalorder 2, %s11
      // Predicated region
      $region45: #{tpu_custom_call.1} parent=5 // pred_check
        %p2510 = pneg %p2509
      $region46: #{tpu_custom_call.1} parent=5 // pred_check_branch
        %2512 = sbr.rel (%p2510) target = $region48
      $region47: #{tpu_custom_call.1} parent=5 // pred_region
        %s2513 = ssub.s32 %s11, 2
        // Predicated region
        $region49: #{tpu_custom_call.1} parent=47 // pred_check
          %p2514 = pneg %p124
        $region50: #{tpu_custom_call.1} parent=47 // pred_check_branch
          %2516 = sbr.rel (%p2514) target = $region52
        $region51: #{tpu_custom_call.1} parent=47 // pred_region
          %s2517 = smul.u32 32, %s23
          %p2518 = scmp.lt.s32.totalorder %s22, 1
          %s2519 = scalar_select %p2518, %s22, 1
          %p2520 = scmp.lt.s32.totalorder %s2517, 31
          %s2521 = scalar_select %p2520, %s2517, 31
          %s2522 = smul.addr %s2521, 8
          %s2523 = smul.addr %s2519, 256
          %s2524 = sadd.s32 %s2522, %s2523
          %s2525 = smul.addr %s2524, 8
          %s2526 = scalar_lea.vmem %s3, %s2525
        $region52: #{tpu_custom_call.1} parent=47 // pred_fallthru
          _
      $region48: #{tpu_custom_call.1} parent=5 // pred_fallthru
        _
    $region6: #{tpu_custom_call.1} parent=1 // loop_footer
      %s15 = sadd.s32 1, %s11
    $region7: #{tpu_custom_call.1} parent=1 // loop_footer_branch
      %10 = sbr.rel target = $region3
    $region8: #{tpu_custom_call.1} parent=1 // loop_exit
      _
    %2527 = vsyncpa [#allocation3], 1
    %s2528 = scalar_lea.sflag [#allocation3], 1
    %2529 = vsyncpa %s2528, 1
    %2530 = vsyncpa [#allocation5], 1

</llo_original>
